<compile_context>
chip_gen: v7x
topology: tpu7x:2x2x1
jax: 0.10.0
libtpu: 0.0.40
codegen_flags: <defaults>
</compile_context>

<pallas_src>
import jax
import jax.numpy as jnp
from jax.experimental import pallas as pl
from jax.experimental.pallas import tpu as pltpu


def _aimai_kernel(x_ref, w1_ref, b1_ref, w2_ref, b2_ref,
                  w3_ref, b3_ref, w4_ref, b4_ref, o_ref):
    cdt = w1_ref.dtype                       # matmul operand dtype (f32 or bf16)
    x = x_ref[...]                           # [TB, Fp]

    # out_mlp1 + relu
    hid = jnp.dot(x, w1_ref[...], preferred_element_type=jnp.float32)
    hid = jnp.maximum(hid + b1_ref[...], 0.0)                   # [TB, Hp] f32

    # mid_mlp1 + residual + relu
    mid = jnp.dot(hid.astype(cdt), w2_ref[...],
                  preferred_element_type=jnp.float32)
    mid = jnp.maximum(mid + b2_ref[...] + hid, 0.0)             # [TB, Hp] f32

    # mid_mlp2 + residual + relu
    mid2 = jnp.dot(mid.astype(cdt), w3_ref[...],
                   preferred_element_type=jnp.float32)
    mid2 = jnp.maximum(mid2 + b3_ref[...] + mid, 0.0)           # [TB, Hp] f32

    # out_mlp2 + sigmoid.  W4 is zero-padded to [Hp, 128] so both the MXU tile
    # and the output store are full-width (unmasked); only column 0 is real.
    logits = jnp.dot(mid2.astype(cdt), w4_ref[...],
                     preferred_element_type=jnp.float32)
    logits = logits + b4_ref[0, 0]                              # scalar bias (SMEM)
    o_ref[...] = jax.nn.sigmoid(logits).astype(o_ref.dtype)     # [TB, 128]


def _round_up(x, m):
    return (x + m - 1) // m * m


def aimai_prediction(features, params, *, tile_b=None, matmul_dtype=jnp.float32):
    """Pallas forward pass.

    features: [B, in_feature] float32
    params:   (w1,b1,w2,b2,w3,b3,w4,b4), weights stored [in, out]
    tile_b:   batch tile (multiple of 8); default picks one tile for small B,
              256-row tiles otherwise.
    matmul_dtype: jnp.float32 (exact) or jnp.bfloat16 (v6e/v7x MXU fast path,
              f32 accumulation).
    """
    w1, b1, w2, b2, w3, b3, w4, b4 = params
    B, F = features.shape
    H = w1.shape[1]
    if w2.shape != (H, H) or w3.shape != (H, H):
        raise ValueError("residual connections require contract == 1 "
                         "(mid_mlp1 / mid_mlp2 must be square)")
    assert w1.shape == (F, H) and w4.shape == (H, 1) and b4.shape == (1, 1)

    if tile_b is None:
        # Small batches: one full-MXU tile (single grid step, no wasted steps).
        # Large batches: 256-row tiles keep VMEM modest and the pipeline deep.
        tile_b = min(256, _round_up(B, 128))

    # ---- pad to TPU-friendly shapes (zero padding keeps the math exact) ----
    Fp = _round_up(F, 128)
    Hp = _round_up(H, 128)
    Bp = _round_up(B, tile_b)
    f32 = jnp.float32

    x = jnp.zeros((Bp, Fp), f32).at[:B, :F].set(features.astype(f32))
    w1p = jnp.zeros((Fp, Hp), f32).at[:F, :H].set(w1.astype(f32))
    w2p = jnp.zeros((Hp, Hp), f32).at[:H, :H].set(w2.astype(f32))
    w3p = jnp.zeros((Hp, Hp), f32).at[:H, :H].set(w3.astype(f32))
    w4p = jnp.zeros((Hp, 128), f32).at[:H, :1].set(w4.astype(f32))
    b1p = jnp.zeros((1, Hp), f32).at[:, :H].set(b1.astype(f32))
    b2p = jnp.zeros((1, Hp), f32).at[:, :H].set(b2.astype(f32))
    b3p = jnp.zeros((1, Hp), f32).at[:, :H].set(b3.astype(f32))
    b4p = b4.astype(f32)                                    # (1,1) scalar -> SMEM

    if jnp.dtype(matmul_dtype) != jnp.dtype(jnp.float32):
        # bf16 MXU operands: halves weight DMA / VMEM; accumulation stays f32.
        x = x.astype(matmul_dtype)
        w1p = w1p.astype(matmul_dtype)
        w2p = w2p.astype(matmul_dtype)
        w3p = w3p.astype(matmul_dtype)
        w4p = w4p.astype(matmul_dtype)

    num_tiles = Bp // tile_b
    item = jnp.dtype(matmul_dtype).itemsize

    def const_spec(shape):
        # Weights/biases never change across the grid: single-buffered.
        return pl.BlockSpec(shape, lambda i: (0, 0), pipeline_mode=pl.Buffered(1))

    # VMEM budget: 1x weights + double-buffered x/out tiles + f32 intermediates.
    weight_bytes = (Fp * Hp + 2 * Hp * Hp + Hp * 128) * item + 3 * Hp * 4
    stream_bytes = 2 * tile_b * Fp * item + 2 * tile_b * 128 * 4
    interm_bytes = 4 * tile_b * Hp * 4
    vmem_limit = int(min(max(2 * (weight_bytes + stream_bytes + interm_bytes),
                             32 * 1024 * 1024), 64 * 1024 * 1024))

    flops = int(2 * Bp * (Fp * Hp + 2 * Hp * Hp + Hp * 128))
    bytes_accessed = int(Bp * Fp * item + weight_bytes + Bp * 128 * 4)

    out = pl.pallas_call(
        _aimai_kernel,
        out_shape=jax.ShapeDtypeStruct((Bp, 128), jnp.float32),
        grid_spec=pltpu.PrefetchScalarGridSpec(
            num_scalar_prefetch=0,
            grid=(num_tiles,),
            in_specs=[
                pl.BlockSpec((tile_b, Fp), lambda i: (i, 0)),   # features tile
                const_spec((Fp, Hp)),                           # W1
                const_spec((1, Hp)),                            # b1
                const_spec((Hp, Hp)),                           # W2
                const_spec((1, Hp)),                            # b2
                const_spec((Hp, Hp)),                           # W3
                const_spec((1, Hp)),                            # b3
                const_spec((Hp, 128)),                          # W4 (padded cols)
                pl.BlockSpec(memory_space=pltpu.MemorySpace.SMEM),  # b4 scalar
            ],
            out_specs=pl.BlockSpec((tile_b, 128), lambda i: (i, 0)),
        ),
        compiler_params=pltpu.CompilerParams(
            dimension_semantics=("parallel",),
            vmem_limit_bytes=vmem_limit),
        cost_estimate=pl.CostEstimate(flops=flops,
                                      transcendentals=int(Bp * 128),
                                      bytes_accessed=bytes_accessed),
    )(x, w1p, b1p, w2p, b2p, w3p, b3p, w4p, b4p)

    # Column 0 holds the real logits; rows beyond B are batch padding.
    return out[:B, :1]


def init_params(key, in_feature, hid_units, contract=1):
    """Deterministic synthetic parameters (shapes match the PyTorch module)."""
    mid_units = hid_units // contract
    ks = jax.random.split(key, 8)

    def lin(kw, kb, fan_in, fan_out):
        # stored as [in, out] so the kernel does x @ W
        w = jax.random.normal(kw, (fan_in, fan_out), jnp.float32) * 0.05
        b = jax.random.normal(kb, (1, fan_out), jnp.float32) * 0.05
        return w, b

    w1, b1 = lin(ks[0], ks[1], in_feature, hid_units)   # out_mlp1
    w2, b2 = lin(ks[2], ks[3], hid_units, mid_units)    # mid_mlp1
    w3, b3 = lin(ks[4], ks[5], mid_units, hid_units)    # mid_mlp2
    w4, b4 = lin(ks[6], ks[7], hid_units, 1)            # out_mlp2
    return (w1, b1, w2, b2, w3, b3, w4, b4)


def reference(features, params):
    """Pure-JAX reference mirroring the PyTorch forward."""
    w1, b1, w2, b2, w3, b3, w4, b4 = params
    hid = jax.nn.relu(features @ w1 + b1)
    mid = jax.nn.relu(hid @ w2 + b2 + hid)
    mid = jax.nn.relu(mid @ w3 + b3 + mid)
    return jax.nn.sigmoid(mid @ w4 + b4)


if __name__ == "__main__":
    # Small shapes consistent with the module defaults (in_feature=69, hid=256).
    # B=200 exercises the batch/feature padding paths (200->256, 69->128).
    B, IN_FEATURE, HID_UNITS = 200, 69, 256

    key = jax.random.PRNGKey(0)
    k_x, k_p = jax.random.split(key)
    features = jax.random.normal(k_x, (B, IN_FEATURE), jnp.float32)
    params = init_params(k_p, IN_FEATURE, HID_UNITS, contract=1)

    ref = reference(features, params)

    # f32 MXU operands (exact module numerics); adaptive tile -> single grid step.
    out = aimai_prediction(features, params)
    out = jax.block_until_ready(out)
    assert out.shape == (B, 1), out.shape
    assert jnp.allclose(out, ref, atol=1e-4, rtol=1e-4), \
        float(jnp.max(jnp.abs(out - ref)))

    # Multi-step pipeline path (tile_b=128 -> 2 grid steps).
    out_tiled = aimai_prediction(features, params, tile_b=128)
    out_tiled = jax.block_until_ready(out_tiled)
    assert jnp.allclose(out_tiled, ref, atol=1e-4, rtol=1e-4), \
        float(jnp.max(jnp.abs(out_tiled - ref)))

    # bf16 MXU operands (v6e/v7x fast path), f32 accumulation -> loose tolerance.
    out_bf16 = aimai_prediction(features, params, tile_b=128,
                                matmul_dtype=jnp.bfloat16)
    out_bf16 = jax.block_until_ready(out_bf16)
    assert out_bf16.shape == (B, 1), out_bf16.shape
    assert jnp.allclose(out_bf16, ref, atol=2e-2), \
        float(jnp.max(jnp.abs(out_bf16 - ref)))

    print("KERNEL_OK")
</pallas_src>

<mosaic_0001>
module attributes {stable_mosaic.version = 11 : i64} {
  func.func @_aimai_kernel(%arg0: i32, %arg1: memref<256x128xf32, #tpu.memory_space<vmem>>, %arg2: memref<128x256xf32, #tpu.memory_space<vmem>>, %arg3: memref<1x256xf32, #tpu.memory_space<vmem>>, %arg4: memref<256x256xf32, #tpu.memory_space<vmem>>, %arg5: memref<1x256xf32, #tpu.memory_space<vmem>>, %arg6: memref<256x256xf32, #tpu.memory_space<vmem>>, %arg7: memref<1x256xf32, #tpu.memory_space<vmem>>, %arg8: memref<256x128xf32, #tpu.memory_space<vmem>>, %arg9: memref<1x1xf32, #tpu.memory_space<smem>>, %arg10: memref<256x128xf32, #tpu.memory_space<vmem>>) attributes {dimension_semantics = [#tpu.dimension_semantics<parallel>], iteration_bounds = array<i64: 1>, scalar_prefetch = 0 : i64, scratch_operands = 0 : i64, tpu.core_type = #tpu.core_type<tc>, window_params = [{transform_indices = @transform_0, window_bounds = array<i64: 256, 128>}, {pipeline_mode = #tpu.pipeline_mode<synchronous>, transform_indices = @transform_1, window_bounds = array<i64: 128, 256>}, {pipeline_mode = #tpu.pipeline_mode<synchronous>, transform_indices = @transform_2, window_bounds = array<i64: 1, 256>}, {pipeline_mode = #tpu.pipeline_mode<synchronous>, transform_indices = @transform_3, window_bounds = array<i64: 256, 256>}, {pipeline_mode = #tpu.pipeline_mode<synchronous>, transform_indices = @transform_4, window_bounds = array<i64: 1, 256>}, {pipeline_mode = #tpu.pipeline_mode<synchronous>, transform_indices = @transform_5, window_bounds = array<i64: 256, 256>}, {pipeline_mode = #tpu.pipeline_mode<synchronous>, transform_indices = @transform_6, window_bounds = array<i64: 1, 256>}, {pipeline_mode = #tpu.pipeline_mode<synchronous>, transform_indices = @transform_7, window_bounds = array<i64: 256, 128>}, {transform_indices = @transform_8, window_bounds = array<i64: 1, 1>}, {transform_indices = @transform_9, window_bounds = array<i64: 256, 128>}]} {
    %c0 = arith.constant 0 : index
    %c0_0 = arith.constant 0 : index
    %0 = vector.load %arg1[%c0, %c0_0] : memref<256x128xf32, #tpu.memory_space<vmem>>, vector<256x128xf32>
    %c0_1 = arith.constant 0 : index
    %c0_2 = arith.constant 0 : index
    %1 = vector.load %arg2[%c0_1, %c0_2] : memref<128x256xf32, #tpu.memory_space<vmem>>, vector<128x256xf32>
    %cst = arith.constant dense<0.000000e+00> : vector<256x256xf32>
    %2 = tpu.matmul %0, %1, %cst {dimension_numbers = #tpu.dot_dimension_numbers<[1], [0], [0], [1], [0, 0, 1, 1], [], []>} : vector<256x128xf32>, vector<128x256xf32>, vector<256x256xf32> -> vector<256x256xf32>
    %c0_3 = arith.constant 0 : index
    %c0_4 = arith.constant 0 : index
    %3 = vector.load %arg3[%c0_3, %c0_4] : memref<1x256xf32, #tpu.memory_space<vmem>>, vector<1x256xf32>
    %4 = vector.broadcast %3 : vector<1x256xf32> to vector<256x256xf32>
    %5 = arith.addf %2, %4 : vector<256x256xf32>
    %cst_5 = arith.constant 0.000000e+00 : f32
    %6 = vector.broadcast %cst_5 : f32 to vector<256x256xf32>
    %7 = arith.maximumf %5, %6 : vector<256x256xf32>
    %c0_6 = arith.constant 0 : index
    %c0_7 = arith.constant 0 : index
    %8 = vector.load %arg4[%c0_6, %c0_7] : memref<256x256xf32, #tpu.memory_space<vmem>>, vector<256x256xf32>
    %cst_8 = arith.constant dense<0.000000e+00> : vector<256x256xf32>
    %9 = tpu.matmul %7, %8, %cst_8 {dimension_numbers = #tpu.dot_dimension_numbers<[1], [0], [0], [1], [0, 0, 1, 1], [], []>} : vector<256x256xf32>, vector<256x256xf32>, vector<256x256xf32> -> vector<256x256xf32>
    %c0_9 = arith.constant 0 : index
    %c0_10 = arith.constant 0 : index
    %10 = vector.load %arg5[%c0_9, %c0_10] : memref<1x256xf32, #tpu.memory_space<vmem>>, vector<1x256xf32>
    %11 = vector.broadcast %10 : vector<1x256xf32> to vector<256x256xf32>
    %12 = arith.addf %9, %11 : vector<256x256xf32>
    %13 = arith.addf %12, %7 : vector<256x256xf32>
    %cst_11 = arith.constant 0.000000e+00 : f32
    %14 = vector.broadcast %cst_11 : f32 to vector<256x256xf32>
    %15 = arith.maximumf %13, %14 : vector<256x256xf32>
    %c0_12 = arith.constant 0 : index
    %c0_13 = arith.constant 0 : index
    %16 = vector.load %arg6[%c0_12, %c0_13] : memref<256x256xf32, #tpu.memory_space<vmem>>, vector<256x256xf32>
    %cst_14 = arith.constant dense<0.000000e+00> : vector<256x256xf32>
    %17 = tpu.matmul %15, %16, %cst_14 {dimension_numbers = #tpu.dot_dimension_numbers<[1], [0], [0], [1], [0, 0, 1, 1], [], []>} : vector<256x256xf32>, vector<256x256xf32>, vector<256x256xf32> -> vector<256x256xf32>
    %c0_15 = arith.constant 0 : index
    %c0_16 = arith.constant 0 : index
    %18 = vector.load %arg7[%c0_15, %c0_16] : memref<1x256xf32, #tpu.memory_space<vmem>>, vector<1x256xf32>
    %19 = vector.broadcast %18 : vector<1x256xf32> to vector<256x256xf32>
    %20 = arith.addf %17, %19 : vector<256x256xf32>
    %21 = arith.addf %20, %15 : vector<256x256xf32>
    %cst_17 = arith.constant 0.000000e+00 : f32
    %22 = vector.broadcast %cst_17 : f32 to vector<256x256xf32>
    %23 = arith.maximumf %21, %22 : vector<256x256xf32>
    %c0_18 = arith.constant 0 : index
    %c0_19 = arith.constant 0 : index
    %24 = vector.load %arg8[%c0_18, %c0_19] : memref<256x128xf32, #tpu.memory_space<vmem>>, vector<256x128xf32>
    %cst_20 = arith.constant dense<0.000000e+00> : vector<256x128xf32>
    %25 = tpu.matmul %23, %24, %cst_20 {dimension_numbers = #tpu.dot_dimension_numbers<[1], [0], [0], [1], [0, 0, 1, 1], [], []>} : vector<256x256xf32>, vector<256x128xf32>, vector<256x128xf32> -> vector<256x128xf32>
    %c0_21 = arith.constant 0 : index
    %c0_22 = arith.constant 0 : index
    %26 = memref.load %arg9[%c0_21, %c0_22] : memref<1x1xf32, #tpu.memory_space<smem>>
    %27 = vector.broadcast %26 : f32 to vector<256x128xf32>
    %28 = arith.addf %25, %27 : vector<256x128xf32>
    %29 = arith.negf %28 : vector<256x128xf32>
    %30 = math.exp %29 : vector<256x128xf32>
    %cst_23 = arith.constant 1.000000e+00 : f32
    %31 = vector.broadcast %cst_23 : f32 to vector<256x128xf32>
    %32 = arith.addf %31, %30 : vector<256x128xf32>
    %33 = arith.divf %31, %32 : vector<256x128xf32>
    %c0_24 = arith.constant 0 : index
    %c0_25 = arith.constant 0 : index
    %34 = vector.load %arg10[%c0_24, %c0_25] : memref<256x128xf32, #tpu.memory_space<vmem>>, vector<256x128xf32>
    tpu.vector_store %arg10[%c0_24, %c0_25], %33 {strides = array<i32>} : memref<256x128xf32, #tpu.memory_space<vmem>>, vector<256x128xf32>,
    return
  }
  func.func @transform_0(%arg0: i32) -> (i32, i32) {
    %c0_i32 = arith.constant 0 : i32
    %c0_i32_0 = arith.constant 0 : i32
    return %arg0, %c0_i32 : i32, i32
  }
  func.func @transform_1(%arg0: i32) -> (i32, i32) {
    %c0_i32 = arith.constant 0 : i32
    %c0_i32_0 = arith.constant 0 : i32
    %c0_i32_1 = arith.constant 0 : i32
    return %c0_i32, %c0_i32_0 : i32, i32
  }
  func.func @transform_2(%arg0: i32) -> (i32, i32) {
    %c0_i32 = arith.constant 0 : i32
    %c0_i32_0 = arith.constant 0 : i32
    %c0_i32_1 = arith.constant 0 : i32
    return %c0_i32, %c0_i32_0 : i32, i32
  }
  func.func @transform_3(%arg0: i32) -> (i32, i32) {
    %c0_i32 = arith.constant 0 : i32
    %c0_i32_0 = arith.constant 0 : i32
    %c0_i32_1 = arith.constant 0 : i32
    return %c0_i32, %c0_i32_0 : i32, i32
  }
  func.func @transform_4(%arg0: i32) -> (i32, i32) {
    %c0_i32 = arith.constant 0 : i32
    %c0_i32_0 = arith.constant 0 : i32
    %c0_i32_1 = arith.constant 0 : i32
    return %c0_i32, %c0_i32_0 : i32, i32
  }
  func.func @transform_5(%arg0: i32) -> (i32, i32) {
    %c0_i32 = arith.constant 0 : i32
    %c0_i32_0 = arith.constant 0 : i32
    %c0_i32_1 = arith.constant 0 : i32
    return %c0_i32, %c0_i32_0 : i32, i32
  }
  func.func @transform_6(%arg0: i32) -> (i32, i32) {
    %c0_i32 = arith.constant 0 : i32
    %c0_i32_0 = arith.constant 0 : i32
    %c0_i32_1 = arith.constant 0 : i32
    return %c0_i32, %c0_i32_0 : i32, i32
  }
  func.func @transform_7(%arg0: i32) -> (i32, i32) {
    %c0_i32 = arith.constant 0 : i32
    %c0_i32_0 = arith.constant 0 : i32
    %c0_i32_1 = arith.constant 0 : i32
    return %c0_i32, %c0_i32_0 : i32, i32
  }
  func.func @transform_8(%arg0: i32) -> (i32, i32) {
    %c0_i32 = arith.constant 0 : i32
    %c0_i32_0 = arith.constant 0 : i32
    %c0_i32_1 = arith.constant 0 : i32
    return %c0_i32, %c0_i32_0 : i32, i32
  }
  func.func @transform_9(%arg0: i32) -> (i32, i32) {
    %c0_i32 = arith.constant 0 : i32
    %c0_i32_0 = arith.constant 0 : i32
    return %arg0, %c0_i32 : i32, i32
  }
}

</mosaic_0001>

<llo_original>
// kernel: tpu_custom_call.1
$region0: #{tpu_custom_call.1}
  #allocation0 [shape = 'u32[]', space=smem, size = 0x4, offset = 0x4, fixed_abs, tag = 'smem constant byte address 0x4 - core index']
  #allocation1 [shape = 'u32[144,128]{1,0:T(1,128)}', space=vmem, size = 0x12000, scoped, tag = 'internal scratch']
  #allocation2 [shape = 'f32[1,1]{1,0:T(1,128)S(6)}', space=smem, size = 0x200, scoped, tag = 'scoped memory for tpu_custom_call.1']
  %s0 = inlined_call_operand.hbm [shape: f32[256,128], index: 0, kind: input, shape index: {}]
  %s1 = inlined_call_operand.hbm [shape: f32[128,256], index: 1, kind: input, shape index: {}]
  %s2 = inlined_call_operand.vmem [shape: f32[1,256], index: 2, kind: input, shape index: {}]
  %s3 = inlined_call_operand.hbm [shape: f32[256,256], index: 3, kind: input, shape index: {}]
  %s4 = inlined_call_operand.vmem [shape: f32[1,256], index: 4, kind: input, shape index: {}]
  %s5 = inlined_call_operand.hbm [shape: f32[256,256], index: 5, kind: input, shape index: {}]
  %s6 = inlined_call_operand.vmem [shape: f32[1,256], index: 6, kind: input, shape index: {}]
  %s7 = inlined_call_operand.hbm [shape: f32[256,128], index: 7, kind: input, shape index: {}]
  %s8 = inlined_call_operand.<no memory space> [shape: f32[1,1], index: 8, kind: input, shape index: {}]
  %s9 = inlined_call_operand.hbm [shape: f32[256,128], index: 9, kind: output, shape index: {}]
  %s10 = sld [smem:[#allocation0]]
  $region66: #{tpu_custom_call.1} parent=0
    _
  %s12 = ssub.s32 1, %s10
  %s13 = scalar_select 0, %s12, %s10
  %14 = sst [smem:[#allocation2]] %s8
  $region1: #{tpu_custom_call.1} parent=0
    #allocation3 [shape = 'u8[131072]{0}', space=vmem, size = 0x20000, scoped, tag = 'input window, operand 0, single buffered']
    #allocation4 [shape = 's32[1]{0}', space=sflag, size = 0x4, scoped, tag = 'scoped memory for tpu_custom_call.1']
    #allocation5 [shape = 's32[1]{0}', space=sflag, size = 0x4, scoped, tag = 'scoped memory for tpu_custom_call.1']
    #allocation6 [shape = 'u8[131072]{0}', space=vmem, size = 0x20000, scoped, tag = 'input window, operand 1, single buffered']
    #allocation7 [shape = 's32[1]{0}', space=sflag, size = 0x4, scoped, tag = 'scoped memory for tpu_custom_call.1']
    #allocation8 [shape = 'u8[262144]{0}', space=vmem, size = 0x40000, scoped, tag = 'input window, operand 3, single buffered']
    #allocation9 [shape = 'u8[262144]{0}', space=vmem, size = 0x40000, scoped, tag = 'input window, operand 5, single buffered']
    #allocation10 [shape = 's32[1]{0}', space=sflag, size = 0x4, scoped, tag = 'scoped memory for tpu_custom_call.1']
    #allocation11 [shape = 'u8[131072]{0}', space=vmem, size = 0x20000, scoped, tag = 'input window, operand 7, single buffered']
    #allocation12 [shape = 'u8[131072]{0}', space=vmem, size = 0x20000, scoped, tag = 'output window, operand 0, single buffered']
    %15 = vsyncpa [#allocation4], 0
    %16 = vsyncpa [#allocation7], 0
    %17 = vsyncpa [#allocation10], 0
    %18 = vsyncpa [#allocation5], 0
    // Predicated region
    $region2: #{tpu_custom_call.1} parent=1 // pred_check
      _
    $region3: #{tpu_custom_call.1} parent=1 // pred_check_branch
      %20 = sbr.rel (0) target = $region5
    $region4: #{tpu_custom_call.1} parent=1 // pred_region
      %s22 = ssub.s32 4096, 4096
      %23 = vsyncadd [#allocation4], %s22
      %s24 = sshll.u32 [#allocation3], 4
      %s25 = int_to_ptr.vmem [resolvable:$true] %s24
      %30 = dma.hbm_to_vmem [thread:$0]  %s0, 4096, %s25, [#allocation4], 128, 128, 8
    $region5: #{tpu_custom_call.1} parent=1 // pred_fallthru
      _
    // Predicated region
    $region6: #{tpu_custom_call.1} parent=1 // pred_check
      _
    $region7: #{tpu_custom_call.1} parent=1 // pred_check_branch
      %32 = sbr.rel (0) target = $region9
    $region8: #{tpu_custom_call.1} parent=1 // pred_region
      %s34 = ssub.s32 4096, 4096
      %35 = vsyncadd [#allocation7], %s34
      %s36 = sshll.u32 [#allocation6], 4
      %s37 = int_to_ptr.vmem [resolvable:$true] %s36
      %42 = dma.hbm_to_vmem [thread:$0]  %s1, 4096, %s37, [#allocation7], 256, 256, 16
    $region9: #{tpu_custom_call.1} parent=1 // pred_fallthru
      _
    // Predicated region
    $region10: #{tpu_custom_call.1} parent=1 // pred_check
      _
    $region11: #{tpu_custom_call.1} parent=1 // pred_check_branch
      %44 = sbr.rel (0) target = $region13
    $region12: #{tpu_custom_call.1} parent=1 // pred_region
      _
    $region13: #{tpu_custom_call.1} parent=1 // pred_fallthru
      _
    // Predicated region
    $region14: #{tpu_custom_call.1} parent=1 // pred_check
      _
    $region15: #{tpu_custom_call.1} parent=1 // pred_check_branch
      %46 = sbr.rel (0) target = $region17
    $region16: #{tpu_custom_call.1} parent=1 // pred_region
      %s48 = ssub.s32 8192, 8192
      %49 = vsyncadd [#allocation7], %s48
      %s50 = sshll.u32 [#allocation8], 4
      %s51 = int_to_ptr.vmem [resolvable:$true] %s50
      %56 = dma.hbm_to_vmem [thread:$0]  %s3, 8192, %s51, [#allocation7], 256, 256, 16
    $region17: #{tpu_custom_call.1} parent=1 // pred_fallthru
      _
    // Predicated region
    $region18: #{tpu_custom_call.1} parent=1 // pred_check
      _
    $region19: #{tpu_custom_call.1} parent=1 // pred_check_branch
      %58 = sbr.rel (0) target = $region21
    $region20: #{tpu_custom_call.1} parent=1 // pred_region
      _
    $region21: #{tpu_custom_call.1} parent=1 // pred_fallthru
      _
    // Predicated region
    $region22: #{tpu_custom_call.1} parent=1 // pred_check
      _
    $region23: #{tpu_custom_call.1} parent=1 // pred_check_branch
      %60 = sbr.rel (0) target = $region25
    $region24: #{tpu_custom_call.1} parent=1 // pred_region
      %s62 = ssub.s32 8192, 8192
      %63 = vsyncadd [#allocation10], %s62
      %s64 = sshll.u32 [#allocation9], 4
      %s65 = int_to_ptr.vmem [resolvable:$true] %s64
      %70 = dma.hbm_to_vmem [thread:$0]  %s5, 8192, %s65, [#allocation10], 256, 256, 16
    $region25: #{tpu_custom_call.1} parent=1 // pred_fallthru
      _
    // Predicated region
    $region26: #{tpu_custom_call.1} parent=1 // pred_check
      _
    $region27: #{tpu_custom_call.1} parent=1 // pred_check_branch
      %72 = sbr.rel (0) target = $region29
    $region28: #{tpu_custom_call.1} parent=1 // pred_region
      _
    $region29: #{tpu_custom_call.1} parent=1 // pred_fallthru
      _
    // Predicated region
    $region30: #{tpu_custom_call.1} parent=1 // pred_check
      _
    $region31: #{tpu_custom_call.1} parent=1 // pred_check_branch
      %74 = sbr.rel (0) target = $region33
    $region32: #{tpu_custom_call.1} parent=1 // pred_region
      %s76 = ssub.s32 4096, 4096
      %77 = vsyncadd [#allocation10], %s76
      %s78 = sshll.u32 [#allocation11], 4
      %s79 = int_to_ptr.vmem [resolvable:$true] %s78
      %84 = dma.hbm_to_vmem [thread:$0]  %s7, 4096, %s79, [#allocation10], 128, 128, 8
    $region33: #{tpu_custom_call.1} parent=1 // pred_fallthru
      _
    // Predicated region
    $region34: #{tpu_custom_call.1} parent=1 // pred_check
      _
    $region35: #{tpu_custom_call.1} parent=1 // pred_check_branch
      %86 = sbr.rel (0) target = $region37
    $region36: #{tpu_custom_call.1} parent=1 // pred_region
      _
    $region37: #{tpu_custom_call.1} parent=1 // pred_fallthru
      _
    // Predicated region
    $region38: #{tpu_custom_call.1} parent=1 // pred_check
      _
    $region39: #{tpu_custom_call.1} parent=1 // pred_check_branch
      %88 = sbr.rel (0) target = $region41
    $region40: #{tpu_custom_call.1} parent=1 // pred_region
      %89 = dma.done [#allocation4], 4096
    $region41: #{tpu_custom_call.1} parent=1 // pred_fallthru
      _
    // Predicated region
    $region42: #{tpu_custom_call.1} parent=1 // pred_check
      _
    $region43: #{tpu_custom_call.1} parent=1 // pred_check_branch
      %91 = sbr.rel (0) target = $region45
    $region44: #{tpu_custom_call.1} parent=1 // pred_region
      %92 = dma.done [#allocation7], 4096
    $region45: #{tpu_custom_call.1} parent=1 // pred_fallthru
      _
    // Predicated region
    $region46: #{tpu_custom_call.1} parent=1 // pred_check
      _
    $region47: #{tpu_custom_call.1} parent=1 // pred_check_branch
      %94 = sbr.rel (0) target = $region49
    $region48: #{tpu_custom_call.1} parent=1 // pred_region
      %95 = dma.done [#allocation7], 8192
    $region49: #{tpu_custom_call.1} parent=1 // pred_fallthru
      _
    // Predicated region
    $region50: #{tpu_custom_call.1} parent=1 // pred_check
      _
    $region51: #{tpu_custom_call.1} parent=1 // pred_check_branch
      %97 = sbr.rel (0) target = $region53
    $region52: #{tpu_custom_call.1} parent=1 // pred_region
      %98 = dma.done [#allocation10], 8192
    $region53: #{tpu_custom_call.1} parent=1 // pred_fallthru
      _
    // Predicated region
    $region54: #{tpu_custom_call.1} parent=1 // pred_check
      _
    $region55: #{tpu_custom_call.1} parent=1 // pred_check_branch
      %100 = sbr.rel (0) target = $region57
    $region56: #{tpu_custom_call.1} parent=1 // pred_region
      %101 = dma.done [#allocation10], 4096
    $region57: #{tpu_custom_call.1} parent=1 // pred_fallthru
      _
    %v102 = vld [vmem:[#allocation3] sm:$0xff]
    %v103 = vld [vmem:[#allocation3 + $0x8] sm:$0xff]
    %v104 = vld [vmem:[#allocation3 + $0x10] sm:$0xff]
    %v105 = vld [vmem:[#allocation3 + $0x18] sm:$0xff]
    %v106 = vld [vmem:[#allocation3 + $0x20] sm:$0xff]
    %v107 = vld [vmem:[#allocation3 + $0x28] sm:$0xff]
    %v108 = vld [vmem:[#allocation3 + $0x30] sm:$0xff]
    %v109 = vld [vmem:[#allocation3 + $0x38] sm:$0xff]
    %v110 = vld [vmem:[#allocation3 + $0x40] sm:$0xff]
    %v111 = vld [vmem:[#allocation3 + $0x48] sm:$0xff]
    %v112 = vld [vmem:[#allocation3 + $0x50] sm:$0xff]
    %v113 = vld [vmem:[#allocation3 + $0x58] sm:$0xff]
    %v114 = vld [vmem:[#allocation3 + $0x60] sm:$0xff]
    %v115 = vld [vmem:[#allocation3 + $0x68] sm:$0xff]
    %v116 = vld [vmem:[#allocation3 + $0x70] sm:$0xff]
    %v117 = vld [vmem:[#allocation3 + $0x78] sm:$0xff]
    %v118 = vld [vmem:[#allocation3 + $0x80] sm:$0xff]
    %v119 = vld [vmem:[#allocation3 + $0x88] sm:$0xff]
    %v120 = vld [vmem:[#allocation3 + $0x90] sm:$0xff]
    %v121 = vld [vmem:[#allocation3 + $0x98] sm:$0xff]
    %v122 = vld [vmem:[#allocation3 + $0xa0] sm:$0xff]
    %v123 = vld [vmem:[#allocation3 + $0xa8] sm:$0xff]
    %v124 = vld [vmem:[#allocation3 + $0xb0] sm:$0xff]
    %v125 = vld [vmem:[#allocation3 + $0xb8] sm:$0xff]
    %v126 = vld [vmem:[#allocation3 + $0xc0] sm:$0xff]
    %v127 = vld [vmem:[#allocation3 + $0xc8] sm:$0xff]
    %v128 = vld [vmem:[#allocation3 + $0xd0] sm:$0xff]
    %v129 = vld [vmem:[#allocation3 + $0xd8] sm:$0xff]
    %v130 = vld [vmem:[#allocation3 + $0xe0] sm:$0xff]
    %v131 = vld [vmem:[#allocation3 + $0xe8] sm:$0xff]
    %v132 = vld [vmem:[#allocation3 + $0xf0] sm:$0xff]
    %v133 = vld [vmem:[#allocation3 + $0xf8] sm:$0xff]
    %v134 = vld [vmem:[#allocation6] sm:$0xff]
    %v135 = vld [vmem:[#allocation6 + $0x8] sm:$0xff]
    %v136 = vld [vmem:[#allocation6 + $0x10] sm:$0xff]
    %v137 = vld [vmem:[#allocation6 + $0x18] sm:$0xff]
    %v138 = vld [vmem:[#allocation6 + $0x20] sm:$0xff]
    %v139 = vld [vmem:[#allocation6 + $0x28] sm:$0xff]
    %v140 = vld [vmem:[#allocation6 + $0x30] sm:$0xff]
    %v141 = vld [vmem:[#allocation6 + $0x38] sm:$0xff]
    %v142 = vld [vmem:[#allocation6 + $0x40] sm:$0xff]
    %v143 = vld [vmem:[#allocation6 + $0x48] sm:$0xff]
    %v144 = vld [vmem:[#allocation6 + $0x50] sm:$0xff]
    %v145 = vld [vmem:[#allocation6 + $0x58] sm:$0xff]
    %v146 = vld [vmem:[#allocation6 + $0x60] sm:$0xff]
    %v147 = vld [vmem:[#allocation6 + $0x68] sm:$0xff]
    %v148 = vld [vmem:[#allocation6 + $0x70] sm:$0xff]
    %v149 = vld [vmem:[#allocation6 + $0x78] sm:$0xff]
    %v150 = vld [vmem:[#allocation6 + $0x80] sm:$0xff]
    %v151 = vld [vmem:[#allocation6 + $0x88] sm:$0xff]
    %v152 = vld [vmem:[#allocation6 + $0x90] sm:$0xff]
    %v153 = vld [vmem:[#allocation6 + $0x98] sm:$0xff]
    %v154 = vld [vmem:[#allocation6 + $0xa0] sm:$0xff]
    %v155 = vld [vmem:[#allocation6 + $0xa8] sm:$0xff]
    %v156 = vld [vmem:[#allocation6 + $0xb0] sm:$0xff]
    %v157 = vld [vmem:[#allocation6 + $0xb8] sm:$0xff]
    %v158 = vld [vmem:[#allocation6 + $0xc0] sm:$0xff]
    %v159 = vld [vmem:[#allocation6 + $0xc8] sm:$0xff]
    %v160 = vld [vmem:[#allocation6 + $0xd0] sm:$0xff]
    %v161 = vld [vmem:[#allocation6 + $0xd8] sm:$0xff]
    %v162 = vld [vmem:[#allocation6 + $0xe0] sm:$0xff]
    %v163 = vld [vmem:[#allocation6 + $0xe8] sm:$0xff]
    %v164 = vld [vmem:[#allocation6 + $0xf0] sm:$0xff]
    %v165 = vld [vmem:[#allocation6 + $0xf8] sm:$0xff]
    %v166 = vld [vmem:[%s2] sm:$0x3]
    %v168 = vlaneseq
    %v169 = vshrl.u32 %v168, 7
    %v170 = vsub.s32 0, %v169
    %v171 = vrot.slane %v166, %v170
    %v172 = vlaneseq
    %v173 = vshrl.u32 %v172, 7
    %v174 = vsub.s32 1, %v173
    %v175 = vrot.slane %v166, %v174
    %178 = vmatprep.subr.mxu0 %v135
    %179 = vmatpush1.msra.mxu0 %v134
    %180 = vmatprep.subr.mxu0 %v137
    %181 = vmatpush1.msra.mxu0 %v136
    %182 = vmatprep.subr.mxu0 %v139
    %183 = vmatpush1.msra.mxu0 %v138
    %184 = vmatprep.subr.mxu0 %v141
    %185 = vmatpush1.msra.mxu0 %v140
    %186 = vmatprep.subr.mxu0 %v143
    %187 = vmatpush1.msra.mxu0 %v142
    %188 = vmatprep.subr.mxu0 %v145
    %189 = vmatpush1.msra.mxu0 %v144
    %190 = vmatprep.subr.mxu0 %v147
    %191 = vmatpush1.msra.mxu0 %v146
    %192 = vmatprep.subr.mxu0 %v149
    %193 = vmatpush1.msra.mxu0 %v148
    %194 = vmatprep.subr.mxu0 %v151
    %195 = vmatpush1.msra.mxu0 %v150
    %196 = vmatprep.subr.mxu0 %v153
    %197 = vmatpush1.msra.mxu0 %v152
    %198 = vmatprep.subr.mxu0 %v155
    %199 = vmatpush1.msra.mxu0 %v154
    %200 = vmatprep.subr.mxu0 %v157
    %201 = vmatpush1.msra.mxu0 %v156
    %202 = vmatprep.subr.mxu0 %v159
    %203 = vmatpush1.msra.mxu0 %v158
    %204 = vmatprep.subr.mxu0 %v161
    %205 = vmatpush1.msra.mxu0 %v160
    %206 = vmatprep.subr.mxu0 %v163
    %207 = vmatpush1.msra.mxu0 %v162
    %208 = vmatprep.subr.mxu0 %v165
    %209 = vmatpush1.msra.mxu0 %v164
    %210 = vmatprep.subr.mxu0 0.0
    %211 = vmatpush1.msra.mxu0 0.0
    %212 = vmatprep.subr.mxu0 0.0
    %213 = vmatpush1.msra.mxu0 0.0
    %214 = vmatprep.subr.mxu0 0.0
    %215 = vmatpush1.msra.mxu0 0.0
    %216 = vmatprep.subr.mxu0 0.0
    %217 = vmatpush1.msra.mxu0 0.0
    %218 = vmatprep.subr.mxu0 0.0
    %219 = vmatpush1.msra.mxu0 0.0
    %220 = vmatprep.subr.mxu0 0.0
    %221 = vmatpush1.msra.mxu0 0.0
    %222 = vmatprep.subr.mxu0 0.0
    %223 = vmatpush1.msra.mxu0 0.0
    %224 = vmatprep.subr.mxu0 0.0
    %225 = vmatpush1.msra.mxu0 0.0
    %226 = vmatprep.subr.mxu0 0.0
    %227 = vmatpush1.msra.mxu0 0.0
    %228 = vmatprep.subr.mxu0 0.0
    %229 = vmatpush1.msra.mxu0 0.0
    %230 = vmatprep.subr.mxu0 0.0
    %231 = vmatpush1.msra.mxu0 0.0
    %232 = vmatprep.subr.mxu0 0.0
    %233 = vmatpush1.msra.mxu0 0.0
    %234 = vmatprep.subr.mxu0 0.0
    %235 = vmatpush1.msra.mxu0 0.0
    %236 = vmatprep.subr.mxu0 0.0
    %237 = vmatpush1.msra.mxu0 0.0
    %238 = vmatprep.subr.mxu0 0.0
    %239 = vmatpush1.msra.mxu0 0.0
    %240 = vmatprep.subr.mxu0 0.0
    %241 = vmatpush1.msra.mxu0 0.0
    %242 = vmatprep.mubr.f32.mxu0 0.0
    %243 = vmatmul.mubr.f32.gmra.mrb[0].mxu0 %v102
    %v244 = vpop.f32.mrb[0].mxu0
    %v245 = vadd.f32 %v171, %v244
    %v246 = vpop.f32.mrb[0].mxu0
    %v247 = vadd.f32 %v175, %v246
    %248 = vmatprep.mubr.f32.mxu0 0.0
    %249 = vmatmul.mubr.f32.gmra.mrb[0].mxu0 %v103
    %v250 = vpop.f32.mrb[0].mxu0
    %v251 = vadd.f32 %v171, %v250
    %v252 = vpop.f32.mrb[0].mxu0
    %v253 = vadd.f32 %v175, %v252
    %254 = vmatprep.mubr.f32.mxu0 0.0
    %255 = vmatmul.mubr.f32.gmra.mrb[0].mxu0 %v104
    %v256 = vpop.f32.mrb[0].mxu0
    %v257 = vadd.f32 %v171, %v256
    %v258 = vpop.f32.mrb[0].mxu0
    %v259 = vadd.f32 %v175, %v258
    %260 = vmatprep.mubr.f32.mxu0 0.0
    %261 = vmatmul.mubr.f32.gmra.mrb[0].mxu0 %v105
    %v262 = vpop.f32.mrb[0].mxu0
    %v263 = vadd.f32 %v171, %v262
    %v264 = vpop.f32.mrb[0].mxu0
    %v265 = vadd.f32 %v175, %v264
    %266 = vmatprep.mubr.f32.mxu0 0.0
    %267 = vmatmul.mubr.f32.gmra.mrb[0].mxu0 %v106
    %v268 = vpop.f32.mrb[0].mxu0
    %v269 = vadd.f32 %v171, %v268
    %v270 = vpop.f32.mrb[0].mxu0
    %v271 = vadd.f32 %v175, %v270
    %272 = vmatprep.mubr.f32.mxu0 0.0
    %273 = vmatmul.mubr.f32.gmra.mrb[0].mxu0 %v107
    %v274 = vpop.f32.mrb[0].mxu0
    %v275 = vadd.f32 %v171, %v274
    %v276 = vpop.f32.mrb[0].mxu0
    %v277 = vadd.f32 %v175, %v276
    %278 = vmatprep.mubr.f32.mxu0 0.0
    %279 = vmatmul.mubr.f32.gmra.mrb[0].mxu0 %v108
    %v280 = vpop.f32.mrb[0].mxu0
    %v281 = vadd.f32 %v171, %v280
    %v282 = vpop.f32.mrb[0].mxu0
    %v283 = vadd.f32 %v175, %v282
    %284 = vmatprep.mubr.f32.mxu0 0.0
    %285 = vmatmul.mubr.f32.gmra.mrb[0].mxu0 %v109
    %v286 = vpop.f32.mrb[0].mxu0
    %v287 = vadd.f32 %v171, %v286
    %v288 = vpop.f32.mrb[0].mxu0
    %v289 = vadd.f32 %v175, %v288
    %290 = vmatprep.mubr.f32.mxu0 0.0
    %291 = vmatmul.mubr.f32.gmra.mrb[0].mxu0 %v110
    %v292 = vpop.f32.mrb[0].mxu0
    %v293 = vadd.f32 %v171, %v292
    %v294 = vpop.f32.mrb[0].mxu0
    %v295 = vadd.f32 %v175, %v294
    %296 = vmatprep.mubr.f32.mxu0 0.0
    %297 = vmatmul.mubr.f32.gmra.mrb[0].mxu0 %v111
    %v298 = vpop.f32.mrb[0].mxu0
    %v299 = vadd.f32 %v171, %v298
    %v300 = vpop.f32.mrb[0].mxu0
    %v301 = vadd.f32 %v175, %v300
    %302 = vmatprep.mubr.f32.mxu0 0.0
    %303 = vmatmul.mubr.f32.gmra.mrb[0].mxu0 %v112
    %v304 = vpop.f32.mrb[0].mxu0
    %v305 = vadd.f32 %v171, %v304
    %v306 = vpop.f32.mrb[0].mxu0
    %v307 = vadd.f32 %v175, %v306
    %308 = vmatprep.mubr.f32.mxu0 0.0
    %309 = vmatmul.mubr.f32.gmra.mrb[0].mxu0 %v113
    %v310 = vpop.f32.mrb[0].mxu0
    %v311 = vadd.f32 %v171, %v310
    %v312 = vpop.f32.mrb[0].mxu0
    %v313 = vadd.f32 %v175, %v312
    %314 = vmatprep.mubr.f32.mxu0 0.0
    %315 = vmatmul.mubr.f32.gmra.mrb[0].mxu0 %v114
    %v316 = vpop.f32.mrb[0].mxu0
    %v317 = vadd.f32 %v171, %v316
    %v318 = vpop.f32.mrb[0].mxu0
    %v319 = vadd.f32 %v175, %v318
    %320 = vmatprep.mubr.f32.mxu0 0.0
    %321 = vmatmul.mubr.f32.gmra.mrb[0].mxu0 %v115
    %v322 = vpop.f32.mrb[0].mxu0
    %v323 = vadd.f32 %v171, %v322
    %v324 = vpop.f32.mrb[0].mxu0
    %v325 = vadd.f32 %v175, %v324
    %326 = vmatprep.mubr.f32.mxu0 0.0
    %327 = vmatmul.mubr.f32.gmra.mrb[0].mxu0 %v116
    %v328 = vpop.f32.mrb[0].mxu0
    %v329 = vadd.f32 %v171, %v328
    %v330 = vpop.f32.mrb[0].mxu0
    %v331 = vadd.f32 %v175, %v330
    %332 = vmatprep.mubr.f32.mxu0 0.0
    %333 = vmatmul.mubr.f32.gmra.mrb[0].mxu0 %v117
    %v334 = vpop.f32.mrb[0].mxu0
    %v335 = vadd.f32 %v171, %v334
    %v336 = vpop.f32.mrb[0].mxu0
    %v337 = vadd.f32 %v175, %v336
    %338 = vmatprep.mubr.f32.mxu0 0.0
    %339 = vmatmul.mubr.f32.gmra.mrb[0].mxu0 %v118
    %v340 = vpop.f32.mrb[0].mxu0
    %v341 = vadd.f32 %v171, %v340
    %v342 = vpop.f32.mrb[0].mxu0
    %v343 = vadd.f32 %v175, %v342
    %344 = vmatprep.mubr.f32.mxu0 0.0
    %345 = vmatmul.mubr.f32.gmra.mrb[0].mxu0 %v119
    %v346 = vpop.f32.mrb[0].mxu0
    %v347 = vadd.f32 %v171, %v346
    %v348 = vpop.f32.mrb[0].mxu0
    %v349 = vadd.f32 %v175, %v348
    %350 = vmatprep.mubr.f32.mxu0 0.0
    %351 = vmatmul.mubr.f32.gmra.mrb[0].mxu0 %v120
    %v352 = vpop.f32.mrb[0].mxu0
    %v353 = vadd.f32 %v171, %v352
    %v354 = vpop.f32.mrb[0].mxu0
    %v355 = vadd.f32 %v175, %v354
    %356 = vmatprep.mubr.f32.mxu0 0.0
    %357 = vmatmul.mubr.f32.gmra.mrb[0].mxu0 %v121
    %v358 = vpop.f32.mrb[0].mxu0
    %v359 = vadd.f32 %v171, %v358
    %v360 = vpop.f32.mrb[0].mxu0
    %v361 = vadd.f32 %v175, %v360
    %362 = vmatprep.mubr.f32.mxu0 0.0
    %363 = vmatmul.mubr.f32.gmra.mrb[0].mxu0 %v122
    %v364 = vpop.f32.mrb[0].mxu0
    %v365 = vadd.f32 %v171, %v364
    %v366 = vpop.f32.mrb[0].mxu0
    %v367 = vadd.f32 %v175, %v366
    %368 = vmatprep.mubr.f32.mxu0 0.0
    %369 = vmatmul.mubr.f32.gmra.mrb[0].mxu0 %v123
    %v370 = vpop.f32.mrb[0].mxu0
    %v371 = vadd.f32 %v171, %v370
    %v372 = vpop.f32.mrb[0].mxu0
    %v373 = vadd.f32 %v175, %v372
    %374 = vmatprep.mubr.f32.mxu0 0.0
    %375 = vmatmul.mubr.f32.gmra.mrb[0].mxu0 %v124
    %v376 = vpop.f32.mrb[0].mxu0
    %v377 = vadd.f32 %v171, %v376
    %v378 = vpop.f32.mrb[0].mxu0
    %v379 = vadd.f32 %v175, %v378
    %380 = vmatprep.mubr.f32.mxu0 0.0
    %381 = vmatmul.mubr.f32.gmra.mrb[0].mxu0 %v125
    %v382 = vpop.f32.mrb[0].mxu0
    %v383 = vadd.f32 %v171, %v382
    %v384 = vpop.f32.mrb[0].mxu0
    %v385 = vadd.f32 %v175, %v384
    %386 = vmatprep.mubr.f32.mxu0 0.0
    %387 = vmatmul.mubr.f32.gmra.mrb[0].mxu0 %v126
    %v388 = vpop.f32.mrb[0].mxu0
    %v389 = vadd.f32 %v171, %v388
    %v390 = vpop.f32.mrb[0].mxu0
    %v391 = vadd.f32 %v175, %v390
    %392 = vmatprep.mubr.f32.mxu0 0.0
    %393 = vmatmul.mubr.f32.gmra.mrb[0].mxu0 %v127
    %v394 = vpop.f32.mrb[0].mxu0
    %v395 = vadd.f32 %v171, %v394
    %v396 = vpop.f32.mrb[0].mxu0
    %v397 = vadd.f32 %v175, %v396
    %398 = vmatprep.mubr.f32.mxu0 0.0
    %399 = vmatmul.mubr.f32.gmra.mrb[0].mxu0 %v128
    %v400 = vpop.f32.mrb[0].mxu0
    %v401 = vadd.f32 %v171, %v400
    %v402 = vpop.f32.mrb[0].mxu0
    %v403 = vadd.f32 %v175, %v402
    %404 = vmatprep.mubr.f32.mxu0 0.0
    %405 = vmatmul.mubr.f32.gmra.mrb[0].mxu0 %v129
    %v406 = vpop.f32.mrb[0].mxu0
    %v407 = vadd.f32 %v171, %v406
    %v408 = vpop.f32.mrb[0].mxu0
    %v409 = vadd.f32 %v175, %v408
    %410 = vmatprep.mubr.f32.mxu0 0.0
    %411 = vmatmul.mubr.f32.gmra.mrb[0].mxu0 %v130
    %v412 = vpop.f32.mrb[0].mxu0
    %v413 = vadd.f32 %v171, %v412
    %v414 = vpop.f32.mrb[0].mxu0
    %v415 = vadd.f32 %v175, %v414
    %416 = vmatprep.mubr.f32.mxu0 0.0
    %417 = vmatmul.mubr.f32.gmra.mrb[0].mxu0 %v131
    %v418 = vpop.f32.mrb[0].mxu0
    %v419 = vadd.f32 %v171, %v418
    %v420 = vpop.f32.mrb[0].mxu0
    %v421 = vadd.f32 %v175, %v420
    %422 = vmatprep.mubr.f32.mxu0 0.0
    %423 = vmatmul.mubr.f32.gmra.mrb[0].mxu0 %v132
    %v424 = vpop.f32.mrb[0].mxu0
    %v425 = vadd.f32 %v171, %v424
    %v426 = vpop.f32.mrb[0].mxu0
    %v427 = vadd.f32 %v175, %v426
    %428 = vmatprep.mubr.f32.mxu0 0.0
    %429 = vmatmul.mubr.f32.gmra.mrb[0].mxu0 %v133
    %v430 = vpop.f32.mrb[0].mxu0
    %v431 = vadd.f32 %v171, %v430
    %v432 = vpop.f32.mrb[0].mxu0
    %v433 = vadd.f32 %v175, %v432
    %434 = vdwg.mxu0
    %v435 = vmax.f32 %v245, 0.0
    %v436 = vmax.f32 %v247, 0.0
    %v437 = vmax.f32 %v251, 0.0
    %v438 = vmax.f32 %v253, 0.0
    %v439 = vmax.f32 %v257, 0.0
    %v440 = vmax.f32 %v259, 0.0
    %v441 = vmax.f32 %v263, 0.0
    %v442 = vmax.f32 %v265, 0.0
    %v443 = vmax.f32 %v269, 0.0
    %v444 = vmax.f32 %v271, 0.0
    %v445 = vmax.f32 %v275, 0.0
    %v446 = vmax.f32 %v277, 0.0
    %v447 = vmax.f32 %v281, 0.0
    %v448 = vmax.f32 %v283, 0.0
    %v449 = vmax.f32 %v287, 0.0
    %v450 = vmax.f32 %v289, 0.0
    %v451 = vmax.f32 %v293, 0.0
    %v452 = vmax.f32 %v295, 0.0
    %v453 = vmax.f32 %v299, 0.0
    %v454 = vmax.f32 %v301, 0.0
    %v455 = vmax.f32 %v305, 0.0
    %v456 = vmax.f32 %v307, 0.0
    %v457 = vmax.f32 %v311, 0.0
    %v458 = vmax.f32 %v313, 0.0
    %v459 = vmax.f32 %v317, 0.0
    %v460 = vmax.f32 %v319, 0.0
    %v461 = vmax.f32 %v323, 0.0
    %v462 = vmax.f32 %v325, 0.0
    %v463 = vmax.f32 %v329, 0.0
    %v464 = vmax.f32 %v331, 0.0
    %v465 = vmax.f32 %v335, 0.0
    %v466 = vmax.f32 %v337, 0.0
    %v467 = vmax.f32 %v341, 0.0
    %v468 = vmax.f32 %v343, 0.0
    %v469 = vmax.f32 %v347, 0.0
    %v470 = vmax.f32 %v349, 0.0
    %v471 = vmax.f32 %v353, 0.0
    %v472 = vmax.f32 %v355, 0.0
    %v473 = vmax.f32 %v359, 0.0
    %v474 = vmax.f32 %v361, 0.0
    %v475 = vmax.f32 %v365, 0.0
    %v476 = vmax.f32 %v367, 0.0
    %v477 = vmax.f32 %v371, 0.0
    %v478 = vmax.f32 %v373, 0.0
    %v479 = vmax.f32 %v377, 0.0
    %v480 = vmax.f32 %v379, 0.0
    %v481 = vmax.f32 %v383, 0.0
    %v482 = vmax.f32 %v385, 0.0
    %v483 = vmax.f32 %v389, 0.0
    %v484 = vmax.f32 %v391, 0.0
    %v485 = vmax.f32 %v395, 0.0
    %v486 = vmax.f32 %v397, 0.0
    %v487 = vmax.f32 %v401, 0.0
    %v488 = vmax.f32 %v403, 0.0
    %v489 = vmax.f32 %v407, 0.0
    %v490 = vmax.f32 %v409, 0.0
    %v491 = vmax.f32 %v413, 0.0
    %v492 = vmax.f32 %v415, 0.0
    %v493 = vmax.f32 %v419, 0.0
    %v494 = vmax.f32 %v421, 0.0
    %v495 = vmax.f32 %v425, 0.0
    %v496 = vmax.f32 %v427, 0.0
    %v497 = vmax.f32 %v431, 0.0
    %v498 = vmax.f32 %v433, 0.0
    %v499 = vld [vmem:[#allocation8] sm:$0xff]
    %v500 = vld [vmem:[#allocation8 + $0x8] sm:$0xff]
    %v501 = vld [vmem:[#allocation8 + $0x10] sm:$0xff]
    %v502 = vld [vmem:[#allocation8 + $0x18] sm:$0xff]
    %v503 = vld [vmem:[#allocation8 + $0x20] sm:$0xff]
    %v504 = vld [vmem:[#allocation8 + $0x28] sm:$0xff]
    %v505 = vld [vmem:[#allocation8 + $0x30] sm:$0xff]
    %v506 = vld [vmem:[#allocation8 + $0x38] sm:$0xff]
    %v507 = vld [vmem:[#allocation8 + $0x40] sm:$0xff]
    %v508 = vld [vmem:[#allocation8 + $0x48] sm:$0xff]
    %v509 = vld [vmem:[#allocation8 + $0x50] sm:$0xff]
    %v510 = vld [vmem:[#allocation8 + $0x58] sm:$0xff]
    %v511 = vld [vmem:[#allocation8 + $0x60] sm:$0xff]
    %v512 = vld [vmem:[#allocation8 + $0x68] sm:$0xff]
    %v513 = vld [vmem:[#allocation8 + $0x70] sm:$0xff]
    %v514 = vld [vmem:[#allocation8 + $0x78] sm:$0xff]
    %v515 = vld [vmem:[#allocation8 + $0x80] sm:$0xff]
    %v516 = vld [vmem:[#allocation8 + $0x88] sm:$0xff]
    %v517 = vld [vmem:[#allocation8 + $0x90] sm:$0xff]
    %v518 = vld [vmem:[#allocation8 + $0x98] sm:$0xff]
    %v519 = vld [vmem:[#allocation8 + $0xa0] sm:$0xff]
    %v520 = vld [vmem:[#allocation8 + $0xa8] sm:$0xff]
    %v521 = vld [vmem:[#allocation8 + $0xb0] sm:$0xff]
    %v522 = vld [vmem:[#allocation8 + $0xb8] sm:$0xff]
    %v523 = vld [vmem:[#allocation8 + $0xc0] sm:$0xff]
    %v524 = vld [vmem:[#allocation8 + $0xc8] sm:$0xff]
    %v525 = vld [vmem:[#allocation8 + $0xd0] sm:$0xff]
    %v526 = vld [vmem:[#allocation8 + $0xd8] sm:$0xff]
    %v527 = vld [vmem:[#allocation8 + $0xe0] sm:$0xff]
    %v528 = vld [vmem:[#allocation8 + $0xe8] sm:$0xff]
    %v529 = vld [vmem:[#allocation8 + $0xf0] sm:$0xff]
    %v530 = vld [vmem:[#allocation8 + $0xf8] sm:$0xff]
    %v531 = vld [vmem:[#allocation8 + $0x100] sm:$0xff]
    %v532 = vld [vmem:[#allocation8 + $0x108] sm:$0xff]
    %v533 = vld [vmem:[#allocation8 + $0x110] sm:$0xff]
    %v534 = vld [vmem:[#allocation8 + $0x118] sm:$0xff]
    %v535 = vld [vmem:[#allocation8 + $0x120] sm:$0xff]
    %v536 = vld [vmem:[#allocation8 + $0x128] sm:$0xff]
    %v537 = vld [vmem:[#allocation8 + $0x130] sm:$0xff]
    %v538 = vld [vmem:[#allocation8 + $0x138] sm:$0xff]
    %v539 = vld [vmem:[#allocation8 + $0x140] sm:$0xff]
    %v540 = vld [vmem:[#allocation8 + $0x148] sm:$0xff]
    %v541 = vld [vmem:[#allocation8 + $0x150] sm:$0xff]
    %v542 = vld [vmem:[#allocation8 + $0x158] sm:$0xff]
    %v543 = vld [vmem:[#allocation8 + $0x160] sm:$0xff]
    %v544 = vld [vmem:[#allocation8 + $0x168] sm:$0xff]
    %v545 = vld [vmem:[#allocation8 + $0x170] sm:$0xff]
    %v546 = vld [vmem:[#allocation8 + $0x178] sm:$0xff]
    %v547 = vld [vmem:[#allocation8 + $0x180] sm:$0xff]
    %v548 = vld [vmem:[#allocation8 + $0x188] sm:$0xff]
    %v549 = vld [vmem:[#allocation8 + $0x190] sm:$0xff]
    %v550 = vld [vmem:[#allocation8 + $0x198] sm:$0xff]
    %v551 = vld [vmem:[#allocation8 + $0x1a0] sm:$0xff]
    %v552 = vld [vmem:[#allocation8 + $0x1a8] sm:$0xff]
    %v553 = vld [vmem:[#allocation8 + $0x1b0] sm:$0xff]
    %v554 = vld [vmem:[#allocation8 + $0x1b8] sm:$0xff]
    %v555 = vld [vmem:[#allocation8 + $0x1c0] sm:$0xff]
    %v556 = vld [vmem:[#allocation8 + $0x1c8] sm:$0xff]
    %v557 = vld [vmem:[#allocation8 + $0x1d0] sm:$0xff]
    %v558 = vld [vmem:[#allocation8 + $0x1d8] sm:$0xff]
    %v559 = vld [vmem:[#allocation8 + $0x1e0] sm:$0xff]
    %v560 = vld [vmem:[#allocation8 + $0x1e8] sm:$0xff]
    %v561 = vld [vmem:[#allocation8 + $0x1f0] sm:$0xff]
    %v562 = vld [vmem:[#allocation8 + $0x1f8] sm:$0xff]
    %v563 = vld [vmem:[%s4] sm:$0x3]
    %v565 = vlaneseq
    %v566 = vshrl.u32 %v565, 7
    %v567 = vsub.s32 0, %v566
    %v568 = vrot.slane %v563, %v567
    %v569 = vlaneseq
    %v570 = vshrl.u32 %v569, 7
    %v571 = vsub.s32 1, %v570
    %v572 = vrot.slane %v563, %v571
    %575 = vmatprep.subr.mxu0 %v500
    %576 = vmatpush1.msra.mxu0 %v499
    %577 = vmatprep.subr.mxu0 %v502
    %578 = vmatpush1.msra.mxu0 %v501
    %579 = vmatprep.subr.mxu0 %v504
    %580 = vmatpush1.msra.mxu0 %v503
    %581 = vmatprep.subr.mxu0 %v506
    %582 = vmatpush1.msra.mxu0 %v505
    %583 = vmatprep.subr.mxu0 %v508
    %584 = vmatpush1.msra.mxu0 %v507
    %585 = vmatprep.subr.mxu0 %v510
    %586 = vmatpush1.msra.mxu0 %v509
    %587 = vmatprep.subr.mxu0 %v512
    %588 = vmatpush1.msra.mxu0 %v511
    %589 = vmatprep.subr.mxu0 %v514
    %590 = vmatpush1.msra.mxu0 %v513
    %591 = vmatprep.subr.mxu0 %v516
    %592 = vmatpush1.msra.mxu0 %v515
    %593 = vmatprep.subr.mxu0 %v518
    %594 = vmatpush1.msra.mxu0 %v517
    %595 = vmatprep.subr.mxu0 %v520
    %596 = vmatpush1.msra.mxu0 %v519
    %597 = vmatprep.subr.mxu0 %v522
    %598 = vmatpush1.msra.mxu0 %v521
    %599 = vmatprep.subr.mxu0 %v524
    %600 = vmatpush1.msra.mxu0 %v523
    %601 = vmatprep.subr.mxu0 %v526
    %602 = vmatpush1.msra.mxu0 %v525
    %603 = vmatprep.subr.mxu0 %v528
    %604 = vmatpush1.msra.mxu0 %v527
    %605 = vmatprep.subr.mxu0 %v530
    %606 = vmatpush1.msra.mxu0 %v529
    %607 = vmatprep.subr.mxu0 %v532
    %608 = vmatpush1.msra.mxu0 %v531
    %609 = vmatprep.subr.mxu0 %v534
    %610 = vmatpush1.msra.mxu0 %v533
    %611 = vmatprep.subr.mxu0 %v536
    %612 = vmatpush1.msra.mxu0 %v535
    %613 = vmatprep.subr.mxu0 %v538
    %614 = vmatpush1.msra.mxu0 %v537
    %615 = vmatprep.subr.mxu0 %v540
    %616 = vmatpush1.msra.mxu0 %v539
    %617 = vmatprep.subr.mxu0 %v542
    %618 = vmatpush1.msra.mxu0 %v541
    %619 = vmatprep.subr.mxu0 %v544
    %620 = vmatpush1.msra.mxu0 %v543
    %621 = vmatprep.subr.mxu0 %v546
    %622 = vmatpush1.msra.mxu0 %v545
    %623 = vmatprep.subr.mxu0 %v548
    %624 = vmatpush1.msra.mxu0 %v547
    %625 = vmatprep.subr.mxu0 %v550
    %626 = vmatpush1.msra.mxu0 %v549
    %627 = vmatprep.subr.mxu0 %v552
    %628 = vmatpush1.msra.mxu0 %v551
    %629 = vmatprep.subr.mxu0 %v554
    %630 = vmatpush1.msra.mxu0 %v553
    %631 = vmatprep.subr.mxu0 %v556
    %632 = vmatpush1.msra.mxu0 %v555
    %633 = vmatprep.subr.mxu0 %v558
    %634 = vmatpush1.msra.mxu0 %v557
    %635 = vmatprep.subr.mxu0 %v560
    %636 = vmatpush1.msra.mxu0 %v559
    %637 = vmatprep.subr.mxu0 %v562
    %638 = vmatpush1.msra.mxu0 %v561
    %639 = vmatprep.mubr.f32.mxu0 %v436
    %640 = vmatmul.mubr.f32.gmra.mrb[0].mxu0 %v435
    %v641 = vpop.f32.mrb[0].mxu0
    %v642 = vadd.f32 %v568, %v641
    %v643 = vpop.f32.mrb[0].mxu0
    %v644 = vadd.f32 %v572, %v643
    %645 = vmatprep.mubr.f32.mxu0 %v438
    %646 = vmatmul.mubr.f32.gmra.mrb[0].mxu0 %v437
    %v647 = vpop.f32.mrb[0].mxu0
    %v648 = vadd.f32 %v568, %v647
    %v649 = vpop.f32.mrb[0].mxu0
    %v650 = vadd.f32 %v572, %v649
    %651 = vmatprep.mubr.f32.mxu0 %v440
    %652 = vmatmul.mubr.f32.gmra.mrb[0].mxu0 %v439
    %v653 = vpop.f32.mrb[0].mxu0
    %v654 = vadd.f32 %v568, %v653
    %v655 = vpop.f32.mrb[0].mxu0
    %v656 = vadd.f32 %v572, %v655
    %657 = vmatprep.mubr.f32.mxu0 %v442
    %658 = vmatmul.mubr.f32.gmra.mrb[0].mxu0 %v441
    %v659 = vpop.f32.mrb[0].mxu0
    %v660 = vadd.f32 %v568, %v659
    %v661 = vpop.f32.mrb[0].mxu0
    %v662 = vadd.f32 %v572, %v661
    %663 = vmatprep.mubr.f32.mxu0 %v444
    %664 = vmatmul.mubr.f32.gmra.mrb[0].mxu0 %v443
    %v665 = vpop.f32.mrb[0].mxu0
    %v666 = vadd.f32 %v568, %v665
    %v667 = vpop.f32.mrb[0].mxu0
    %v668 = vadd.f32 %v572, %v667
    %669 = vmatprep.mubr.f32.mxu0 %v446
    %670 = vmatmul.mubr.f32.gmra.mrb[0].mxu0 %v445
    %v671 = vpop.f32.mrb[0].mxu0
    %v672 = vadd.f32 %v568, %v671
    %v673 = vpop.f32.mrb[0].mxu0
    %v674 = vadd.f32 %v572, %v673
    %675 = vmatprep.mubr.f32.mxu0 %v448
    %676 = vmatmul.mubr.f32.gmra.mrb[0].mxu0 %v447
    %v677 = vpop.f32.mrb[0].mxu0
    %v678 = vadd.f32 %v568, %v677
    %v679 = vpop.f32.mrb[0].mxu0
    %v680 = vadd.f32 %v572, %v679
    %681 = vmatprep.mubr.f32.mxu0 %v450
    %682 = vmatmul.mubr.f32.gmra.mrb[0].mxu0 %v449
    %v683 = vpop.f32.mrb[0].mxu0
    %v684 = vadd.f32 %v568, %v683
    %v685 = vpop.f32.mrb[0].mxu0
    %v686 = vadd.f32 %v572, %v685
    %687 = vmatprep.mubr.f32.mxu0 %v452
    %688 = vmatmul.mubr.f32.gmra.mrb[0].mxu0 %v451
    %v689 = vpop.f32.mrb[0].mxu0
    %v690 = vadd.f32 %v568, %v689
    %v691 = vpop.f32.mrb[0].mxu0
    %v692 = vadd.f32 %v572, %v691
    %693 = vmatprep.mubr.f32.mxu0 %v454
    %694 = vmatmul.mubr.f32.gmra.mrb[0].mxu0 %v453
    %v695 = vpop.f32.mrb[0].mxu0
    %v696 = vadd.f32 %v568, %v695
    %v697 = vpop.f32.mrb[0].mxu0
    %v698 = vadd.f32 %v572, %v697
    %699 = vmatprep.mubr.f32.mxu0 %v456
    %700 = vmatmul.mubr.f32.gmra.mrb[0].mxu0 %v455
    %v701 = vpop.f32.mrb[0].mxu0
    %v702 = vadd.f32 %v568, %v701
    %v703 = vpop.f32.mrb[0].mxu0
    %v704 = vadd.f32 %v572, %v703
    %705 = vmatprep.mubr.f32.mxu0 %v458
    %706 = vmatmul.mubr.f32.gmra.mrb[0].mxu0 %v457
    %v707 = vpop.f32.mrb[0].mxu0
    %v708 = vadd.f32 %v568, %v707
    %v709 = vpop.f32.mrb[0].mxu0
    %v710 = vadd.f32 %v572, %v709
    %711 = vmatprep.mubr.f32.mxu0 %v460
    %712 = vmatmul.mubr.f32.gmra.mrb[0].mxu0 %v459
    %v713 = vpop.f32.mrb[0].mxu0
    %v714 = vadd.f32 %v568, %v713
    %v715 = vpop.f32.mrb[0].mxu0
    %v716 = vadd.f32 %v572, %v715
    %717 = vmatprep.mubr.f32.mxu0 %v462
    %718 = vmatmul.mubr.f32.gmra.mrb[0].mxu0 %v461
    %v719 = vpop.f32.mrb[0].mxu0
    %v720 = vadd.f32 %v568, %v719
    %v721 = vpop.f32.mrb[0].mxu0
    %v722 = vadd.f32 %v572, %v721
    %723 = vmatprep.mubr.f32.mxu0 %v464
    %724 = vmatmul.mubr.f32.gmra.mrb[0].mxu0 %v463
    %v725 = vpop.f32.mrb[0].mxu0
    %v726 = vadd.f32 %v568, %v725
    %v727 = vpop.f32.mrb[0].mxu0
    %v728 = vadd.f32 %v572, %v727
    %729 = vmatprep.mubr.f32.mxu0 %v466
    %730 = vmatmul.mubr.f32.gmra.mrb[0].mxu0 %v465
    %v731 = vpop.f32.mrb[0].mxu0
    %v732 = vadd.f32 %v568, %v731
    %v733 = vpop.f32.mrb[0].mxu0
    %v734 = vadd.f32 %v572, %v733
    %735 = vmatprep.mubr.f32.mxu0 %v468
    %736 = vmatmul.mubr.f32.gmra.mrb[0].mxu0 %v467
    %v737 = vpop.f32.mrb[0].mxu0
    %v738 = vadd.f32 %v568, %v737
    %v739 = vpop.f32.mrb[0].mxu0
    %v740 = vadd.f32 %v572, %v739
    %741 = vmatprep.mubr.f32.mxu0 %v470
    %742 = vmatmul.mubr.f32.gmra.mrb[0].mxu0 %v469
    %v743 = vpop.f32.mrb[0].mxu0
    %v744 = vadd.f32 %v568, %v743
    %v745 = vpop.f32.mrb[0].mxu0
    %v746 = vadd.f32 %v572, %v745
    %747 = vmatprep.mubr.f32.mxu0 %v472
    %748 = vmatmul.mubr.f32.gmra.mrb[0].mxu0 %v471
    %v749 = vpop.f32.mrb[0].mxu0
    %v750 = vadd.f32 %v568, %v749
    %v751 = vpop.f32.mrb[0].mxu0
    %v752 = vadd.f32 %v572, %v751
    %753 = vmatprep.mubr.f32.mxu0 %v474
    %754 = vmatmul.mubr.f32.gmra.mrb[0].mxu0 %v473
    %v755 = vpop.f32.mrb[0].mxu0
    %v756 = vadd.f32 %v568, %v755
    %v757 = vpop.f32.mrb[0].mxu0
    %v758 = vadd.f32 %v572, %v757
    %759 = vmatprep.mubr.f32.mxu0 %v476
    %760 = vmatmul.mubr.f32.gmra.mrb[0].mxu0 %v475
    %v761 = vpop.f32.mrb[0].mxu0
    %v762 = vadd.f32 %v568, %v761
    %v763 = vpop.f32.mrb[0].mxu0
    %v764 = vadd.f32 %v572, %v763
    %765 = vmatprep.mubr.f32.mxu0 %v478
    %766 = vmatmul.mubr.f32.gmra.mrb[0].mxu0 %v477
    %v767 = vpop.f32.mrb[0].mxu0
    %v768 = vadd.f32 %v568, %v767
    %v769 = vpop.f32.mrb[0].mxu0
    %v770 = vadd.f32 %v572, %v769
    %771 = vmatprep.mubr.f32.mxu0 %v480
    %772 = vmatmul.mubr.f32.gmra.mrb[0].mxu0 %v479
    %v773 = vpop.f32.mrb[0].mxu0
    %v774 = vadd.f32 %v568, %v773
    %v775 = vpop.f32.mrb[0].mxu0
    %v776 = vadd.f32 %v572, %v775
    %777 = vmatprep.mubr.f32.mxu0 %v482
    %778 = vmatmul.mubr.f32.gmra.mrb[0].mxu0 %v481
    %v779 = vpop.f32.mrb[0].mxu0
    %v780 = vadd.f32 %v568, %v779
    %v781 = vpop.f32.mrb[0].mxu0
    %v782 = vadd.f32 %v572, %v781
    %783 = vmatprep.mubr.f32.mxu0 %v484
    %784 = vmatmul.mubr.f32.gmra.mrb[0].mxu0 %v483
    %v785 = vpop.f32.mrb[0].mxu0
    %v786 = vadd.f32 %v568, %v785
    %v787 = vpop.f32.mrb[0].mxu0
    %v788 = vadd.f32 %v572, %v787
    %789 = vmatprep.mubr.f32.mxu0 %v486
    %790 = vmatmul.mubr.f32.gmra.mrb[0].mxu0 %v485
    %v791 = vpop.f32.mrb[0].mxu0
    %v792 = vadd.f32 %v568, %v791
    %v793 = vpop.f32.mrb[0].mxu0
    %v794 = vadd.f32 %v572, %v793
    %795 = vmatprep.mubr.f32.mxu0 %v488
    %796 = vmatmul.mubr.f32.gmra.mrb[0].mxu0 %v487
    %v797 = vpop.f32.mrb[0].mxu0
    %v798 = vadd.f32 %v568, %v797
    %v799 = vpop.f32.mrb[0].mxu0
    %v800 = vadd.f32 %v572, %v799
    %801 = vmatprep.mubr.f32.mxu0 %v490
    %802 = vmatmul.mubr.f32.gmra.mrb[0].mxu0 %v489
    %v803 = vpop.f32.mrb[0].mxu0
    %v804 = vadd.f32 %v568, %v803
    %v805 = vpop.f32.mrb[0].mxu0
    %v806 = vadd.f32 %v572, %v805
    %807 = vmatprep.mubr.f32.mxu0 %v492
    %808 = vmatmul.mubr.f32.gmra.mrb[0].mxu0 %v491
    %v809 = vpop.f32.mrb[0].mxu0
    %v810 = vadd.f32 %v568, %v809
    %v811 = vpop.f32.mrb[0].mxu0
    %v812 = vadd.f32 %v572, %v811
    %813 = vmatprep.mubr.f32.mxu0 %v494
    %814 = vmatmul.mubr.f32.gmra.mrb[0].mxu0 %v493
    %v815 = vpop.f32.mrb[0].mxu0
    %v816 = vadd.f32 %v568, %v815
    %v817 = vpop.f32.mrb[0].mxu0
    %v818 = vadd.f32 %v572, %v817
    %819 = vmatprep.mubr.f32.mxu0 %v496
    %820 = vmatmul.mubr.f32.gmra.mrb[0].mxu0 %v495
    %v821 = vpop.f32.mrb[0].mxu0
    %v822 = vadd.f32 %v568, %v821
    %v823 = vpop.f32.mrb[0].mxu0
    %v824 = vadd.f32 %v572, %v823
    %825 = vmatprep.mubr.f32.mxu0 %v498
    %826 = vmatmul.mubr.f32.gmra.mrb[0].mxu0 %v497
    %v827 = vpop.f32.mrb[0].mxu0
    %v828 = vadd.f32 %v568, %v827
    %v829 = vpop.f32.mrb[0].mxu0
    %v830 = vadd.f32 %v572, %v829
    %831 = vdwg.mxu0
    %v832 = vadd.f32 %v642, %v435
    %v833 = vadd.f32 %v644, %v436
    %v834 = vadd.f32 %v648, %v437
    %v835 = vadd.f32 %v650, %v438
    %v836 = vadd.f32 %v654, %v439
    %v837 = vadd.f32 %v656, %v440
    %v838 = vadd.f32 %v660, %v441
    %v839 = vadd.f32 %v662, %v442
    %v840 = vadd.f32 %v666, %v443
    %v841 = vadd.f32 %v668, %v444
    %v842 = vadd.f32 %v672, %v445
    %v843 = vadd.f32 %v674, %v446
    %v844 = vadd.f32 %v678, %v447
    %v845 = vadd.f32 %v680, %v448
    %v846 = vadd.f32 %v684, %v449
    %v847 = vadd.f32 %v686, %v450
    %v848 = vadd.f32 %v690, %v451
    %v849 = vadd.f32 %v692, %v452
    %v850 = vadd.f32 %v696, %v453
    %v851 = vadd.f32 %v698, %v454
    %v852 = vadd.f32 %v702, %v455
    %v853 = vadd.f32 %v704, %v456
    %v854 = vadd.f32 %v708, %v457
    %v855 = vadd.f32 %v710, %v458
    %v856 = vadd.f32 %v714, %v459
    %v857 = vadd.f32 %v716, %v460
    %v858 = vadd.f32 %v720, %v461
    %v859 = vadd.f32 %v722, %v462
    %v860 = vadd.f32 %v726, %v463
    %v861 = vadd.f32 %v728, %v464
    %v862 = vadd.f32 %v732, %v465
    %v863 = vadd.f32 %v734, %v466
    %v864 = vadd.f32 %v738, %v467
    %v865 = vadd.f32 %v740, %v468
    %v866 = vadd.f32 %v744, %v469
    %v867 = vadd.f32 %v746, %v470
    %v868 = vadd.f32 %v750, %v471
    %v869 = vadd.f32 %v752, %v472
    %v870 = vadd.f32 %v756, %v473
    %v871 = vadd.f32 %v758, %v474
    %v872 = vadd.f32 %v762, %v475
    %v873 = vadd.f32 %v764, %v476
    %v874 = vadd.f32 %v768, %v477
    %v875 = vadd.f32 %v770, %v478
    %v876 = vadd.f32 %v774, %v479
    %v877 = vadd.f32 %v776, %v480
    %v878 = vadd.f32 %v780, %v481
    %v879 = vadd.f32 %v782, %v482
    %v880 = vadd.f32 %v786, %v483
    %v881 = vadd.f32 %v788, %v484
    %v882 = vadd.f32 %v792, %v485
    %v883 = vadd.f32 %v794, %v486
    %v884 = vadd.f32 %v798, %v487
    %v885 = vadd.f32 %v800, %v488
    %v886 = vadd.f32 %v804, %v489
    %v887 = vadd.f32 %v806, %v490
    %v888 = vadd.f32 %v810, %v491
    %v889 = vadd.f32 %v812, %v492
    %v890 = vadd.f32 %v816, %v493
    %v891 = vadd.f32 %v818, %v494
    %v892 = vadd.f32 %v822, %v495
    %v893 = vadd.f32 %v824, %v496
    %v894 = vadd.f32 %v828, %v497
    %v895 = vadd.f32 %v830, %v498
    %v896 = vmax.f32 %v832, 0.0
    %v897 = vmax.f32 %v833, 0.0
    %v898 = vmax.f32 %v834, 0.0
    %v899 = vmax.f32 %v835, 0.0
    %v900 = vmax.f32 %v836, 0.0
    %v901 = vmax.f32 %v837, 0.0
    %v902 = vmax.f32 %v838, 0.0
    %v903 = vmax.f32 %v839, 0.0
    %v904 = vmax.f32 %v840, 0.0
    %v905 = vmax.f32 %v841, 0.0
    %v906 = vmax.f32 %v842, 0.0
    %v907 = vmax.f32 %v843, 0.0
    %v908 = vmax.f32 %v844, 0.0
    %v909 = vmax.f32 %v845, 0.0
    %v910 = vmax.f32 %v846, 0.0
    %v911 = vmax.f32 %v847, 0.0
    %v912 = vmax.f32 %v848, 0.0
    %v913 = vmax.f32 %v849, 0.0
    %v914 = vmax.f32 %v850, 0.0
    %v915 = vmax.f32 %v851, 0.0
    %v916 = vmax.f32 %v852, 0.0
    %v917 = vmax.f32 %v853, 0.0
    %v918 = vmax.f32 %v854, 0.0
    %v919 = vmax.f32 %v855, 0.0
    %v920 = vmax.f32 %v856, 0.0
    %v921 = vmax.f32 %v857, 0.0
    %v922 = vmax.f32 %v858, 0.0
    %v923 = vmax.f32 %v859, 0.0
    %v924 = vmax.f32 %v860, 0.0
    %v925 = vmax.f32 %v861, 0.0
    %v926 = vmax.f32 %v862, 0.0
    %v927 = vmax.f32 %v863, 0.0
    %v928 = vmax.f32 %v864, 0.0
    %v929 = vmax.f32 %v865, 0.0
    %v930 = vmax.f32 %v866, 0.0
    %v931 = vmax.f32 %v867, 0.0
    %v932 = vmax.f32 %v868, 0.0
    %v933 = vmax.f32 %v869, 0.0
    %v934 = vmax.f32 %v870, 0.0
    %v935 = vmax.f32 %v871, 0.0
    %v936 = vmax.f32 %v872, 0.0
    %v937 = vmax.f32 %v873, 0.0
    %v938 = vmax.f32 %v874, 0.0
    %v939 = vmax.f32 %v875, 0.0
    %v940 = vmax.f32 %v876, 0.0
    %v941 = vmax.f32 %v877, 0.0
    %v942 = vmax.f32 %v878, 0.0
    %v943 = vmax.f32 %v879, 0.0
    %v944 = vmax.f32 %v880, 0.0
    %v945 = vmax.f32 %v881, 0.0
    %v946 = vmax.f32 %v882, 0.0
    %v947 = vmax.f32 %v883, 0.0
    %v948 = vmax.f32 %v884, 0.0
    %v949 = vmax.f32 %v885, 0.0
    %v950 = vmax.f32 %v886, 0.0
    %v951 = vmax.f32 %v887, 0.0
    %v952 = vmax.f32 %v888, 0.0
    %v953 = vmax.f32 %v889, 0.0
    %v954 = vmax.f32 %v890, 0.0
    %v955 = vmax.f32 %v891, 0.0
    %v956 = vmax.f32 %v892, 0.0
    %v957 = vmax.f32 %v893, 0.0
    %v958 = vmax.f32 %v894, 0.0
    %v959 = vmax.f32 %v895, 0.0
    %v960 = vld [vmem:[#allocation9] sm:$0xff]
    %v961 = vld [vmem:[#allocation9 + $0x8] sm:$0xff]
    %v962 = vld [vmem:[#allocation9 + $0x10] sm:$0xff]
    %v963 = vld [vmem:[#allocation9 + $0x18] sm:$0xff]
    %v964 = vld [vmem:[#allocation9 + $0x20] sm:$0xff]
    %v965 = vld [vmem:[#allocation9 + $0x28] sm:$0xff]
    %v966 = vld [vmem:[#allocation9 + $0x30] sm:$0xff]
    %v967 = vld [vmem:[#allocation9 + $0x38] sm:$0xff]
    %v968 = vld [vmem:[#allocation9 + $0x40] sm:$0xff]
    %v969 = vld [vmem:[#allocation9 + $0x48] sm:$0xff]
    %v970 = vld [vmem:[#allocation9 + $0x50] sm:$0xff]
    %v971 = vld [vmem:[#allocation9 + $0x58] sm:$0xff]
    %v972 = vld [vmem:[#allocation9 + $0x60] sm:$0xff]
    %v973 = vld [vmem:[#allocation9 + $0x68] sm:$0xff]
    %v974 = vld [vmem:[#allocation9 + $0x70] sm:$0xff]
    %v975 = vld [vmem:[#allocation9 + $0x78] sm:$0xff]
    %v976 = vld [vmem:[#allocation9 + $0x80] sm:$0xff]
    %v977 = vld [vmem:[#allocation9 + $0x88] sm:$0xff]
    %v978 = vld [vmem:[#allocation9 + $0x90] sm:$0xff]
    %v979 = vld [vmem:[#allocation9 + $0x98] sm:$0xff]
    %v980 = vld [vmem:[#allocation9 + $0xa0] sm:$0xff]
    %v981 = vld [vmem:[#allocation9 + $0xa8] sm:$0xff]
    %v982 = vld [vmem:[#allocation9 + $0xb0] sm:$0xff]
    %v983 = vld [vmem:[#allocation9 + $0xb8] sm:$0xff]
    %v984 = vld [vmem:[#allocation9 + $0xc0] sm:$0xff]
    %v985 = vld [vmem:[#allocation9 + $0xc8] sm:$0xff]
    %v986 = vld [vmem:[#allocation9 + $0xd0] sm:$0xff]
    %v987 = vld [vmem:[#allocation9 + $0xd8] sm:$0xff]
    %v988 = vld [vmem:[#allocation9 + $0xe0] sm:$0xff]
    %v989 = vld [vmem:[#allocation9 + $0xe8] sm:$0xff]
    %v990 = vld [vmem:[#allocation9 + $0xf0] sm:$0xff]
    %v991 = vld [vmem:[#allocation9 + $0xf8] sm:$0xff]
    %v992 = vld [vmem:[#allocation9 + $0x100] sm:$0xff]
    %v993 = vld [vmem:[#allocation9 + $0x108] sm:$0xff]
    %v994 = vld [vmem:[#allocation9 + $0x110] sm:$0xff]
    %v995 = vld [vmem:[#allocation9 + $0x118] sm:$0xff]
    %v996 = vld [vmem:[#allocation9 + $0x120] sm:$0xff]
    %v997 = vld [vmem:[#allocation9 + $0x128] sm:$0xff]
    %v998 = vld [vmem:[#allocation9 + $0x130] sm:$0xff]
    %v999 = vld [vmem:[#allocation9 + $0x138] sm:$0xff]
    %v1000 = vld [vmem:[#allocation9 + $0x140] sm:$0xff]
    %v1001 = vld [vmem:[#allocation9 + $0x148] sm:$0xff]
    %v1002 = vld [vmem:[#allocation9 + $0x150] sm:$0xff]
    %v1003 = vld [vmem:[#allocation9 + $0x158] sm:$0xff]
    %v1004 = vld [vmem:[#allocation9 + $0x160] sm:$0xff]
    %v1005 = vld [vmem:[#allocation9 + $0x168] sm:$0xff]
    %v1006 = vld [vmem:[#allocation9 + $0x170] sm:$0xff]
    %v1007 = vld [vmem:[#allocation9 + $0x178] sm:$0xff]
    %v1008 = vld [vmem:[#allocation9 + $0x180] sm:$0xff]
    %v1009 = vld [vmem:[#allocation9 + $0x188] sm:$0xff]
    %v1010 = vld [vmem:[#allocation9 + $0x190] sm:$0xff]
    %v1011 = vld [vmem:[#allocation9 + $0x198] sm:$0xff]
    %v1012 = vld [vmem:[#allocation9 + $0x1a0] sm:$0xff]
    %v1013 = vld [vmem:[#allocation9 + $0x1a8] sm:$0xff]
    %v1014 = vld [vmem:[#allocation9 + $0x1b0] sm:$0xff]
    %v1015 = vld [vmem:[#allocation9 + $0x1b8] sm:$0xff]
    %v1016 = vld [vmem:[#allocation9 + $0x1c0] sm:$0xff]
    %v1017 = vld [vmem:[#allocation9 + $0x1c8] sm:$0xff]
    %v1018 = vld [vmem:[#allocation9 + $0x1d0] sm:$0xff]
    %v1019 = vld [vmem:[#allocation9 + $0x1d8] sm:$0xff]
    %v1020 = vld [vmem:[#allocation9 + $0x1e0] sm:$0xff]
    %v1021 = vld [vmem:[#allocation9 + $0x1e8] sm:$0xff]
    %v1022 = vld [vmem:[#allocation9 + $0x1f0] sm:$0xff]
    %v1023 = vld [vmem:[#allocation9 + $0x1f8] sm:$0xff]
    %v1024 = vld [vmem:[%s6] sm:$0x3]
    %v1026 = vlaneseq
    %v1027 = vshrl.u32 %v1026, 7
    %v1028 = vsub.s32 0, %v1027
    %v1029 = vrot.slane %v1024, %v1028
    %v1030 = vlaneseq
    %v1031 = vshrl.u32 %v1030, 7
    %v1032 = vsub.s32 1, %v1031
    %v1033 = vrot.slane %v1024, %v1032
    %1036 = vmatprep.subr.mxu0 %v961
    %1037 = vmatpush1.msra.mxu0 %v960
    %1038 = vmatprep.subr.mxu0 %v963
    %1039 = vmatpush1.msra.mxu0 %v962
    %1040 = vmatprep.subr.mxu0 %v965
    %1041 = vmatpush1.msra.mxu0 %v964
    %1042 = vmatprep.subr.mxu0 %v967
    %1043 = vmatpush1.msra.mxu0 %v966
    %1044 = vmatprep.subr.mxu0 %v969
    %1045 = vmatpush1.msra.mxu0 %v968
    %1046 = vmatprep.subr.mxu0 %v971
    %1047 = vmatpush1.msra.mxu0 %v970
    %1048 = vmatprep.subr.mxu0 %v973
    %1049 = vmatpush1.msra.mxu0 %v972
    %1050 = vmatprep.subr.mxu0 %v975
    %1051 = vmatpush1.msra.mxu0 %v974
    %1052 = vmatprep.subr.mxu0 %v977
    %1053 = vmatpush1.msra.mxu0 %v976
    %1054 = vmatprep.subr.mxu0 %v979
    %1055 = vmatpush1.msra.mxu0 %v978
    %1056 = vmatprep.subr.mxu0 %v981
    %1057 = vmatpush1.msra.mxu0 %v980
    %1058 = vmatprep.subr.mxu0 %v983
    %1059 = vmatpush1.msra.mxu0 %v982
    %1060 = vmatprep.subr.mxu0 %v985
    %1061 = vmatpush1.msra.mxu0 %v984
    %1062 = vmatprep.subr.mxu0 %v987
    %1063 = vmatpush1.msra.mxu0 %v986
    %1064 = vmatprep.subr.mxu0 %v989
    %1065 = vmatpush1.msra.mxu0 %v988
    %1066 = vmatprep.subr.mxu0 %v991
    %1067 = vmatpush1.msra.mxu0 %v990
    %1068 = vmatprep.subr.mxu0 %v993
    %1069 = vmatpush1.msra.mxu0 %v992
    %1070 = vmatprep.subr.mxu0 %v995
    %1071 = vmatpush1.msra.mxu0 %v994
    %1072 = vmatprep.subr.mxu0 %v997
    %1073 = vmatpush1.msra.mxu0 %v996
    %1074 = vmatprep.subr.mxu0 %v999
    %1075 = vmatpush1.msra.mxu0 %v998
    %1076 = vmatprep.subr.mxu0 %v1001
    %1077 = vmatpush1.msra.mxu0 %v1000
    %1078 = vmatprep.subr.mxu0 %v1003
    %1079 = vmatpush1.msra.mxu0 %v1002
    %1080 = vmatprep.subr.mxu0 %v1005
    %1081 = vmatpush1.msra.mxu0 %v1004
    %1082 = vmatprep.subr.mxu0 %v1007
    %1083 = vmatpush1.msra.mxu0 %v1006
    %1084 = vmatprep.subr.mxu0 %v1009
    %1085 = vmatpush1.msra.mxu0 %v1008
    %1086 = vmatprep.subr.mxu0 %v1011
    %1087 = vmatpush1.msra.mxu0 %v1010
    %1088 = vmatprep.subr.mxu0 %v1013
    %1089 = vmatpush1.msra.mxu0 %v1012
    %1090 = vmatprep.subr.mxu0 %v1015
    %1091 = vmatpush1.msra.mxu0 %v1014
    %1092 = vmatprep.subr.mxu0 %v1017
    %1093 = vmatpush1.msra.mxu0 %v1016
    %1094 = vmatprep.subr.mxu0 %v1019
    %1095 = vmatpush1.msra.mxu0 %v1018
    %1096 = vmatprep.subr.mxu0 %v1021
    %1097 = vmatpush1.msra.mxu0 %v1020
    %1098 = vmatprep.subr.mxu0 %v1023
    %1099 = vmatpush1.msra.mxu0 %v1022
    %1100 = vmatprep.mubr.f32.mxu0 %v897
    %1101 = vmatmul.mubr.f32.gmra.mrb[0].mxu0 %v896
    %v1102 = vpop.f32.mrb[0].mxu0
    %v1103 = vadd.f32 %v1029, %v1102
    %v1104 = vpop.f32.mrb[0].mxu0
    %v1105 = vadd.f32 %v1033, %v1104
    %1106 = vmatprep.mubr.f32.mxu0 %v899
    %1107 = vmatmul.mubr.f32.gmra.mrb[0].mxu0 %v898
    %v1108 = vpop.f32.mrb[0].mxu0
    %v1109 = vadd.f32 %v1029, %v1108
    %v1110 = vpop.f32.mrb[0].mxu0
    %v1111 = vadd.f32 %v1033, %v1110
    %1112 = vmatprep.mubr.f32.mxu0 %v901
    %1113 = vmatmul.mubr.f32.gmra.mrb[0].mxu0 %v900
    %v1114 = vpop.f32.mrb[0].mxu0
    %v1115 = vadd.f32 %v1029, %v1114
    %v1116 = vpop.f32.mrb[0].mxu0
    %v1117 = vadd.f32 %v1033, %v1116
    %1118 = vmatprep.mubr.f32.mxu0 %v903
    %1119 = vmatmul.mubr.f32.gmra.mrb[0].mxu0 %v902
    %v1120 = vpop.f32.mrb[0].mxu0
    %v1121 = vadd.f32 %v1029, %v1120
    %v1122 = vpop.f32.mrb[0].mxu0
    %v1123 = vadd.f32 %v1033, %v1122
    %1124 = vmatprep.mubr.f32.mxu0 %v905
    %1125 = vmatmul.mubr.f32.gmra.mrb[0].mxu0 %v904
    %v1126 = vpop.f32.mrb[0].mxu0
    %v1127 = vadd.f32 %v1029, %v1126
    %v1128 = vpop.f32.mrb[0].mxu0
    %v1129 = vadd.f32 %v1033, %v1128
    %1130 = vmatprep.mubr.f32.mxu0 %v907
    %1131 = vmatmul.mubr.f32.gmra.mrb[0].mxu0 %v906
    %v1132 = vpop.f32.mrb[0].mxu0
    %v1133 = vadd.f32 %v1029, %v1132
    %v1134 = vpop.f32.mrb[0].mxu0
    %v1135 = vadd.f32 %v1033, %v1134
    %1136 = vmatprep.mubr.f32.mxu0 %v909
    %1137 = vmatmul.mubr.f32.gmra.mrb[0].mxu0 %v908
    %v1138 = vpop.f32.mrb[0].mxu0
    %v1139 = vadd.f32 %v1029, %v1138
    %v1140 = vpop.f32.mrb[0].mxu0
    %v1141 = vadd.f32 %v1033, %v1140
    %1142 = vmatprep.mubr.f32.mxu0 %v911
    %1143 = vmatmul.mubr.f32.gmra.mrb[0].mxu0 %v910
    %v1144 = vpop.f32.mrb[0].mxu0
    %v1145 = vadd.f32 %v1029, %v1144
    %v1146 = vpop.f32.mrb[0].mxu0
    %v1147 = vadd.f32 %v1033, %v1146
    %1148 = vmatprep.mubr.f32.mxu0 %v913
    %1149 = vmatmul.mubr.f32.gmra.mrb[0].mxu0 %v912
    %v1150 = vpop.f32.mrb[0].mxu0
    %v1151 = vadd.f32 %v1029, %v1150
    %v1152 = vpop.f32.mrb[0].mxu0
    %v1153 = vadd.f32 %v1033, %v1152
    %1154 = vmatprep.mubr.f32.mxu0 %v915
    %1155 = vmatmul.mubr.f32.gmra.mrb[0].mxu0 %v914
    %v1156 = vpop.f32.mrb[0].mxu0
    %v1157 = vadd.f32 %v1029, %v1156
    %v1158 = vpop.f32.mrb[0].mxu0
    %v1159 = vadd.f32 %v1033, %v1158
    %1160 = vmatprep.mubr.f32.mxu0 %v917
    %1161 = vmatmul.mubr.f32.gmra.mrb[0].mxu0 %v916
    %v1162 = vpop.f32.mrb[0].mxu0
    %v1163 = vadd.f32 %v1029, %v1162
    %v1164 = vpop.f32.mrb[0].mxu0
    %v1165 = vadd.f32 %v1033, %v1164
    %1166 = vmatprep.mubr.f32.mxu0 %v919
    %1167 = vmatmul.mubr.f32.gmra.mrb[0].mxu0 %v918
    %v1168 = vpop.f32.mrb[0].mxu0
    %v1169 = vadd.f32 %v1029, %v1168
    %v1170 = vpop.f32.mrb[0].mxu0
    %v1171 = vadd.f32 %v1033, %v1170
    %1172 = vmatprep.mubr.f32.mxu0 %v921
    %1173 = vmatmul.mubr.f32.gmra.mrb[0].mxu0 %v920
    %v1174 = vpop.f32.mrb[0].mxu0
    %v1175 = vadd.f32 %v1029, %v1174
    %v1176 = vpop.f32.mrb[0].mxu0
    %v1177 = vadd.f32 %v1033, %v1176
    %1178 = vmatprep.mubr.f32.mxu0 %v923
    %1179 = vmatmul.mubr.f32.gmra.mrb[0].mxu0 %v922
    %v1180 = vpop.f32.mrb[0].mxu0
    %v1181 = vadd.f32 %v1029, %v1180
    %v1182 = vpop.f32.mrb[0].mxu0
    %v1183 = vadd.f32 %v1033, %v1182
    %1184 = vmatprep.mubr.f32.mxu0 %v925
    %1185 = vmatmul.mubr.f32.gmra.mrb[0].mxu0 %v924
    %v1186 = vpop.f32.mrb[0].mxu0
    %v1187 = vadd.f32 %v1029, %v1186
    %v1188 = vpop.f32.mrb[0].mxu0
    %v1189 = vadd.f32 %v1033, %v1188
    %1190 = vmatprep.mubr.f32.mxu0 %v927
    %1191 = vmatmul.mubr.f32.gmra.mrb[0].mxu0 %v926
    %v1192 = vpop.f32.mrb[0].mxu0
    %v1193 = vadd.f32 %v1029, %v1192
    %v1194 = vpop.f32.mrb[0].mxu0
    %v1195 = vadd.f32 %v1033, %v1194
    %1196 = vmatprep.mubr.f32.mxu0 %v929
    %1197 = vmatmul.mubr.f32.gmra.mrb[0].mxu0 %v928
    %v1198 = vpop.f32.mrb[0].mxu0
    %v1199 = vadd.f32 %v1029, %v1198
    %v1200 = vpop.f32.mrb[0].mxu0
    %v1201 = vadd.f32 %v1033, %v1200
    %1202 = vmatprep.mubr.f32.mxu0 %v931
    %1203 = vmatmul.mubr.f32.gmra.mrb[0].mxu0 %v930
    %v1204 = vpop.f32.mrb[0].mxu0
    %v1205 = vadd.f32 %v1029, %v1204
    %v1206 = vpop.f32.mrb[0].mxu0
    %v1207 = vadd.f32 %v1033, %v1206
    %1208 = vmatprep.mubr.f32.mxu0 %v933
    %1209 = vmatmul.mubr.f32.gmra.mrb[0].mxu0 %v932
    %v1210 = vpop.f32.mrb[0].mxu0
    %v1211 = vadd.f32 %v1029, %v1210
    %v1212 = vpop.f32.mrb[0].mxu0
    %v1213 = vadd.f32 %v1033, %v1212
    %1214 = vmatprep.mubr.f32.mxu0 %v935
    %1215 = vmatmul.mubr.f32.gmra.mrb[0].mxu0 %v934
    %v1216 = vpop.f32.mrb[0].mxu0
    %v1217 = vadd.f32 %v1029, %v1216
    %v1218 = vpop.f32.mrb[0].mxu0
    %v1219 = vadd.f32 %v1033, %v1218
    %1220 = vmatprep.mubr.f32.mxu0 %v937
    %1221 = vmatmul.mubr.f32.gmra.mrb[0].mxu0 %v936
    %v1222 = vpop.f32.mrb[0].mxu0
    %v1223 = vadd.f32 %v1029, %v1222
    %v1224 = vpop.f32.mrb[0].mxu0
    %v1225 = vadd.f32 %v1033, %v1224
    %1226 = vmatprep.mubr.f32.mxu0 %v939
    %1227 = vmatmul.mubr.f32.gmra.mrb[0].mxu0 %v938
    %v1228 = vpop.f32.mrb[0].mxu0
    %v1229 = vadd.f32 %v1029, %v1228
    %v1230 = vpop.f32.mrb[0].mxu0
    %v1231 = vadd.f32 %v1033, %v1230
    %1232 = vmatprep.mubr.f32.mxu0 %v941
    %1233 = vmatmul.mubr.f32.gmra.mrb[0].mxu0 %v940
    %v1234 = vpop.f32.mrb[0].mxu0
    %v1235 = vadd.f32 %v1029, %v1234
    %v1236 = vpop.f32.mrb[0].mxu0
    %v1237 = vadd.f32 %v1033, %v1236
    %1238 = vmatprep.mubr.f32.mxu0 %v943
    %1239 = vmatmul.mubr.f32.gmra.mrb[0].mxu0 %v942
    %v1240 = vpop.f32.mrb[0].mxu0
    %v1241 = vadd.f32 %v1029, %v1240
    %v1242 = vpop.f32.mrb[0].mxu0
    %v1243 = vadd.f32 %v1033, %v1242
    %1244 = vmatprep.mubr.f32.mxu0 %v945
    %1245 = vmatmul.mubr.f32.gmra.mrb[0].mxu0 %v944
    %v1246 = vpop.f32.mrb[0].mxu0
    %v1247 = vadd.f32 %v1029, %v1246
    %v1248 = vpop.f32.mrb[0].mxu0
    %v1249 = vadd.f32 %v1033, %v1248
    %1250 = vmatprep.mubr.f32.mxu0 %v947
    %1251 = vmatmul.mubr.f32.gmra.mrb[0].mxu0 %v946
    %v1252 = vpop.f32.mrb[0].mxu0
    %v1253 = vadd.f32 %v1029, %v1252
    %v1254 = vpop.f32.mrb[0].mxu0
    %v1255 = vadd.f32 %v1033, %v1254
    %1256 = vmatprep.mubr.f32.mxu0 %v949
    %1257 = vmatmul.mubr.f32.gmra.mrb[0].mxu0 %v948
    %v1258 = vpop.f32.mrb[0].mxu0
    %v1259 = vadd.f32 %v1029, %v1258
    %v1260 = vpop.f32.mrb[0].mxu0
    %v1261 = vadd.f32 %v1033, %v1260
    %1262 = vmatprep.mubr.f32.mxu0 %v951
    %1263 = vmatmul.mubr.f32.gmra.mrb[0].mxu0 %v950
    %v1264 = vpop.f32.mrb[0].mxu0
    %v1265 = vadd.f32 %v1029, %v1264
    %v1266 = vpop.f32.mrb[0].mxu0
    %v1267 = vadd.f32 %v1033, %v1266
    %1268 = vmatprep.mubr.f32.mxu0 %v953
    %1269 = vmatmul.mubr.f32.gmra.mrb[0].mxu0 %v952
    %v1270 = vpop.f32.mrb[0].mxu0
    %v1271 = vadd.f32 %v1029, %v1270
    %v1272 = vpop.f32.mrb[0].mxu0
    %v1273 = vadd.f32 %v1033, %v1272
    %1274 = vmatprep.mubr.f32.mxu0 %v955
    %1275 = vmatmul.mubr.f32.gmra.mrb[0].mxu0 %v954
    %v1276 = vpop.f32.mrb[0].mxu0
    %v1277 = vadd.f32 %v1029, %v1276
    %v1278 = vpop.f32.mrb[0].mxu0
    %v1279 = vadd.f32 %v1033, %v1278
    %1280 = vmatprep.mubr.f32.mxu0 %v957
    %1281 = vmatmul.mubr.f32.gmra.mrb[0].mxu0 %v956
    %v1282 = vpop.f32.mrb[0].mxu0
    %v1283 = vadd.f32 %v1029, %v1282
    %v1284 = vpop.f32.mrb[0].mxu0
    %v1285 = vadd.f32 %v1033, %v1284
    %1286 = vmatprep.mubr.f32.mxu0 %v959
    %1287 = vmatmul.mubr.f32.gmra.mrb[0].mxu0 %v958
    %v1288 = vpop.f32.mrb[0].mxu0
    %v1289 = vadd.f32 %v1029, %v1288
    %v1290 = vpop.f32.mrb[0].mxu0
    %v1291 = vadd.f32 %v1033, %v1290
    %1292 = vdwg.mxu0
    %v1293 = vadd.f32 %v1103, %v896
    %v1294 = vadd.f32 %v1105, %v897
    %v1295 = vadd.f32 %v1109, %v898
    %v1296 = vadd.f32 %v1111, %v899
    %v1297 = vadd.f32 %v1115, %v900
    %v1298 = vadd.f32 %v1117, %v901
    %v1299 = vadd.f32 %v1121, %v902
    %v1300 = vadd.f32 %v1123, %v903
    %v1301 = vadd.f32 %v1127, %v904
    %v1302 = vadd.f32 %v1129, %v905
    %v1303 = vadd.f32 %v1133, %v906
    %v1304 = vadd.f32 %v1135, %v907
    %v1305 = vadd.f32 %v1139, %v908
    %v1306 = vadd.f32 %v1141, %v909
    %v1307 = vadd.f32 %v1145, %v910
    %v1308 = vadd.f32 %v1147, %v911
    %v1309 = vadd.f32 %v1151, %v912
    %v1310 = vadd.f32 %v1153, %v913
    %v1311 = vadd.f32 %v1157, %v914
    %v1312 = vadd.f32 %v1159, %v915
    %v1313 = vadd.f32 %v1163, %v916
    %v1314 = vadd.f32 %v1165, %v917
    %v1315 = vadd.f32 %v1169, %v918
    %v1316 = vadd.f32 %v1171, %v919
    %v1317 = vadd.f32 %v1175, %v920
    %v1318 = vadd.f32 %v1177, %v921
    %v1319 = vadd.f32 %v1181, %v922
    %v1320 = vadd.f32 %v1183, %v923
    %v1321 = vadd.f32 %v1187, %v924
    %v1322 = vadd.f32 %v1189, %v925
    %v1323 = vadd.f32 %v1193, %v926
    %v1324 = vadd.f32 %v1195, %v927
    %v1325 = vadd.f32 %v1199, %v928
    %v1326 = vadd.f32 %v1201, %v929
    %v1327 = vadd.f32 %v1205, %v930
    %v1328 = vadd.f32 %v1207, %v931
    %v1329 = vadd.f32 %v1211, %v932
    %v1330 = vadd.f32 %v1213, %v933
    %v1331 = vadd.f32 %v1217, %v934
    %v1332 = vadd.f32 %v1219, %v935
    %v1333 = vadd.f32 %v1223, %v936
    %v1334 = vadd.f32 %v1225, %v937
    %v1335 = vadd.f32 %v1229, %v938
    %v1336 = vadd.f32 %v1231, %v939
    %v1337 = vadd.f32 %v1235, %v940
    %v1338 = vadd.f32 %v1237, %v941
    %v1339 = vadd.f32 %v1241, %v942
    %v1340 = vadd.f32 %v1243, %v943
    %v1341 = vadd.f32 %v1247, %v944
    %v1342 = vadd.f32 %v1249, %v945
    %v1343 = vadd.f32 %v1253, %v946
    %v1344 = vadd.f32 %v1255, %v947
    %v1345 = vadd.f32 %v1259, %v948
    %v1346 = vadd.f32 %v1261, %v949
    %v1347 = vadd.f32 %v1265, %v950
    %v1348 = vadd.f32 %v1267, %v951
    %v1349 = vadd.f32 %v1271, %v952
    %v1350 = vadd.f32 %v1273, %v953
    %v1351 = vadd.f32 %v1277, %v954
    %v1352 = vadd.f32 %v1279, %v955
    %v1353 = vadd.f32 %v1283, %v956
    %v1354 = vadd.f32 %v1285, %v957
    %v1355 = vadd.f32 %v1289, %v958
    %v1356 = vadd.f32 %v1291, %v959
    %v1357 = vmax.f32 %v1293, 0.0
    %v1358 = vmax.f32 %v1294, 0.0
    %v1359 = vmax.f32 %v1295, 0.0
    %v1360 = vmax.f32 %v1296, 0.0
    %v1361 = vmax.f32 %v1297, 0.0
    %v1362 = vmax.f32 %v1298, 0.0
    %v1363 = vmax.f32 %v1299, 0.0
    %v1364 = vmax.f32 %v1300, 0.0
    %v1365 = vmax.f32 %v1301, 0.0
    %v1366 = vmax.f32 %v1302, 0.0
    %v1367 = vmax.f32 %v1303, 0.0
    %v1368 = vmax.f32 %v1304, 0.0
    %v1369 = vmax.f32 %v1305, 0.0
    %v1370 = vmax.f32 %v1306, 0.0
    %v1371 = vmax.f32 %v1307, 0.0
    %v1372 = vmax.f32 %v1308, 0.0
    %v1373 = vmax.f32 %v1309, 0.0
    %v1374 = vmax.f32 %v1310, 0.0
    %v1375 = vmax.f32 %v1311, 0.0
    %v1376 = vmax.f32 %v1312, 0.0
    %v1377 = vmax.f32 %v1313, 0.0
    %v1378 = vmax.f32 %v1314, 0.0
    %v1379 = vmax.f32 %v1315, 0.0
    %v1380 = vmax.f32 %v1316, 0.0
    %v1381 = vmax.f32 %v1317, 0.0
    %v1382 = vmax.f32 %v1318, 0.0
    %v1383 = vmax.f32 %v1319, 0.0
    %v1384 = vmax.f32 %v1320, 0.0
    %v1385 = vmax.f32 %v1321, 0.0
    %v1386 = vmax.f32 %v1322, 0.0
    %v1387 = vmax.f32 %v1323, 0.0
    %v1388 = vmax.f32 %v1324, 0.0
    %v1389 = vmax.f32 %v1325, 0.0
    %v1390 = vmax.f32 %v1326, 0.0
    %v1391 = vmax.f32 %v1327, 0.0
    %v1392 = vmax.f32 %v1328, 0.0
    %v1393 = vmax.f32 %v1329, 0.0
    %v1394 = vmax.f32 %v1330, 0.0
    %v1395 = vmax.f32 %v1331, 0.0
    %v1396 = vmax.f32 %v1332, 0.0
    %v1397 = vmax.f32 %v1333, 0.0
    %v1398 = vmax.f32 %v1334, 0.0
    %v1399 = vmax.f32 %v1335, 0.0
    %v1400 = vmax.f32 %v1336, 0.0
    %v1401 = vmax.f32 %v1337, 0.0
    %v1402 = vmax.f32 %v1338, 0.0
    %v1403 = vmax.f32 %v1339, 0.0
    %v1404 = vmax.f32 %v1340, 0.0
    %v1405 = vmax.f32 %v1341, 0.0
    %v1406 = vmax.f32 %v1342, 0.0
    %v1407 = vmax.f32 %v1343, 0.0
    %v1408 = vmax.f32 %v1344, 0.0
    %v1409 = vmax.f32 %v1345, 0.0
    %v1410 = vmax.f32 %v1346, 0.0
    %v1411 = vmax.f32 %v1347, 0.0
    %v1412 = vmax.f32 %v1348, 0.0
    %v1413 = vmax.f32 %v1349, 0.0
    %v1414 = vmax.f32 %v1350, 0.0
    %v1415 = vmax.f32 %v1351, 0.0
    %v1416 = vmax.f32 %v1352, 0.0
    %v1417 = vmax.f32 %v1353, 0.0
    %v1418 = vmax.f32 %v1354, 0.0
    %v1419 = vmax.f32 %v1355, 0.0
    %v1420 = vmax.f32 %v1356, 0.0
    %v1421 = vld [vmem:[#allocation11] sm:$0xff]
    %v1422 = vld [vmem:[#allocation11 + $0x8] sm:$0xff]
    %v1423 = vld [vmem:[#allocation11 + $0x10] sm:$0xff]
    %v1424 = vld [vmem:[#allocation11 + $0x18] sm:$0xff]
    %v1425 = vld [vmem:[#allocation11 + $0x20] sm:$0xff]
    %v1426 = vld [vmem:[#allocation11 + $0x28] sm:$0xff]
    %v1427 = vld [vmem:[#allocation11 + $0x30] sm:$0xff]
    %v1428 = vld [vmem:[#allocation11 + $0x38] sm:$0xff]
    %v1429 = vld [vmem:[#allocation11 + $0x40] sm:$0xff]
    %v1430 = vld [vmem:[#allocation11 + $0x48] sm:$0xff]
    %v1431 = vld [vmem:[#allocation11 + $0x50] sm:$0xff]
    %v1432 = vld [vmem:[#allocation11 + $0x58] sm:$0xff]
    %v1433 = vld [vmem:[#allocation11 + $0x60] sm:$0xff]
    %v1434 = vld [vmem:[#allocation11 + $0x68] sm:$0xff]
    %v1435 = vld [vmem:[#allocation11 + $0x70] sm:$0xff]
    %v1436 = vld [vmem:[#allocation11 + $0x78] sm:$0xff]
    %v1437 = vld [vmem:[#allocation11 + $0x80] sm:$0xff]
    %v1438 = vld [vmem:[#allocation11 + $0x88] sm:$0xff]
    %v1439 = vld [vmem:[#allocation11 + $0x90] sm:$0xff]
    %v1440 = vld [vmem:[#allocation11 + $0x98] sm:$0xff]
    %v1441 = vld [vmem:[#allocation11 + $0xa0] sm:$0xff]
    %v1442 = vld [vmem:[#allocation11 + $0xa8] sm:$0xff]
    %v1443 = vld [vmem:[#allocation11 + $0xb0] sm:$0xff]
    %v1444 = vld [vmem:[#allocation11 + $0xb8] sm:$0xff]
    %v1445 = vld [vmem:[#allocation11 + $0xc0] sm:$0xff]
    %v1446 = vld [vmem:[#allocation11 + $0xc8] sm:$0xff]
    %v1447 = vld [vmem:[#allocation11 + $0xd0] sm:$0xff]
    %v1448 = vld [vmem:[#allocation11 + $0xd8] sm:$0xff]
    %v1449 = vld [vmem:[#allocation11 + $0xe0] sm:$0xff]
    %v1450 = vld [vmem:[#allocation11 + $0xe8] sm:$0xff]
    %v1451 = vld [vmem:[#allocation11 + $0xf0] sm:$0xff]
    %v1452 = vld [vmem:[#allocation11 + $0xf8] sm:$0xff]
    %s1453 = sld [smem:[#allocation2]]
    %v1454 = vstv %s1453
    %1455 = vmatprep.subr.mxu0 0.0
    %1456 = vmatpush1.msra.mxu0 %v1421
    %1457 = vmatprep.subr.mxu0 0.0
    %1458 = vmatpush1.msra.mxu0 %v1422
    %1459 = vmatprep.subr.mxu0 0.0
    %1460 = vmatpush1.msra.mxu0 %v1423
    %1461 = vmatprep.subr.mxu0 0.0
    %1462 = vmatpush1.msra.mxu0 %v1424
    %1463 = vmatprep.subr.mxu0 0.0
    %1464 = vmatpush1.msra.mxu0 %v1425
    %1465 = vmatprep.subr.mxu0 0.0
    %1466 = vmatpush1.msra.mxu0 %v1426
    %1467 = vmatprep.subr.mxu0 0.0
    %1468 = vmatpush1.msra.mxu0 %v1427
    %1469 = vmatprep.subr.mxu0 0.0
    %1470 = vmatpush1.msra.mxu0 %v1428
    %1471 = vmatprep.subr.mxu0 0.0
    %1472 = vmatpush1.msra.mxu0 %v1429
    %1473 = vmatprep.subr.mxu0 0.0
    %1474 = vmatpush1.msra.mxu0 %v1430
    %1475 = vmatprep.subr.mxu0 0.0
    %1476 = vmatpush1.msra.mxu0 %v1431
    %1477 = vmatprep.subr.mxu0 0.0
    %1478 = vmatpush1.msra.mxu0 %v1432
    %1479 = vmatprep.subr.mxu0 0.0
    %1480 = vmatpush1.msra.mxu0 %v1433
    %1481 = vmatprep.subr.mxu0 0.0
    %1482 = vmatpush1.msra.mxu0 %v1434
    %1483 = vmatprep.subr.mxu0 0.0
    %1484 = vmatpush1.msra.mxu0 %v1435
    %1485 = vmatprep.subr.mxu0 0.0
    %1486 = vmatpush1.msra.mxu0 %v1436
    %1487 = vmatprep.subr.mxu0 0.0
    %1488 = vmatpush1.msra.mxu0 %v1437
    %1489 = vmatprep.subr.mxu0 0.0
    %1490 = vmatpush1.msra.mxu0 %v1438
    %1491 = vmatprep.subr.mxu0 0.0
    %1492 = vmatpush1.msra.mxu0 %v1439
    %1493 = vmatprep.subr.mxu0 0.0
    %1494 = vmatpush1.msra.mxu0 %v1440
    %1495 = vmatprep.subr.mxu0 0.0
    %1496 = vmatpush1.msra.mxu0 %v1441
    %1497 = vmatprep.subr.mxu0 0.0
    %1498 = vmatpush1.msra.mxu0 %v1442
    %1499 = vmatprep.subr.mxu0 0.0
    %1500 = vmatpush1.msra.mxu0 %v1443
    %1501 = vmatprep.subr.mxu0 0.0
    %1502 = vmatpush1.msra.mxu0 %v1444
    %1503 = vmatprep.subr.mxu0 0.0
    %1504 = vmatpush1.msra.mxu0 %v1445
    %1505 = vmatprep.subr.mxu0 0.0
    %1506 = vmatpush1.msra.mxu0 %v1446
    %1507 = vmatprep.subr.mxu0 0.0
    %1508 = vmatpush1.msra.mxu0 %v1447
    %1509 = vmatprep.subr.mxu0 0.0
    %1510 = vmatpush1.msra.mxu0 %v1448
    %1511 = vmatprep.subr.mxu0 0.0
    %1512 = vmatpush1.msra.mxu0 %v1449
    %1513 = vmatprep.subr.mxu0 0.0
    %1514 = vmatpush1.msra.mxu0 %v1450
    %1515 = vmatprep.subr.mxu0 0.0
    %1516 = vmatpush1.msra.mxu0 %v1451
    %1517 = vmatprep.subr.mxu0 0.0
    %1518 = vmatpush1.msra.mxu0 %v1452
    %1519 = vmatprep.mubr.f32.mxu0 %v1358
    %1520 = vmatmul.mubr.f32.gmra.mrb[0].mxu0 %v1357
    %v1521 = vpop.f32.mrb[0].mxu0
    %v1522 = vadd.f32 %v1454, %v1521
    %v1523 = vpop.f32.mrb[0].mxu0
    %1524 = vmatprep.mubr.f32.mxu0 %v1360
    %1525 = vmatmul.mubr.f32.gmra.mrb[0].mxu0 %v1359
    %v1526 = vpop.f32.mrb[0].mxu0
    %v1527 = vadd.f32 %v1454, %v1526
    %v1528 = vpop.f32.mrb[0].mxu0
    %1529 = vmatprep.mubr.f32.mxu0 %v1362
    %1530 = vmatmul.mubr.f32.gmra.mrb[0].mxu0 %v1361
    %v1531 = vpop.f32.mrb[0].mxu0
    %v1532 = vadd.f32 %v1454, %v1531
    %v1533 = vpop.f32.mrb[0].mxu0
    %1534 = vmatprep.mubr.f32.mxu0 %v1364
    %1535 = vmatmul.mubr.f32.gmra.mrb[0].mxu0 %v1363
    %v1536 = vpop.f32.mrb[0].mxu0
    %v1537 = vadd.f32 %v1454, %v1536
    %v1538 = vpop.f32.mrb[0].mxu0
    %1539 = vmatprep.mubr.f32.mxu0 %v1366
    %1540 = vmatmul.mubr.f32.gmra.mrb[0].mxu0 %v1365
    %v1541 = vpop.f32.mrb[0].mxu0
    %v1542 = vadd.f32 %v1454, %v1541
    %v1543 = vpop.f32.mrb[0].mxu0
    %1544 = vmatprep.mubr.f32.mxu0 %v1368
    %1545 = vmatmul.mubr.f32.gmra.mrb[0].mxu0 %v1367
    %v1546 = vpop.f32.mrb[0].mxu0
    %v1547 = vadd.f32 %v1454, %v1546
    %v1548 = vpop.f32.mrb[0].mxu0
    %1549 = vmatprep.mubr.f32.mxu0 %v1370
    %1550 = vmatmul.mubr.f32.gmra.mrb[0].mxu0 %v1369
    %v1551 = vpop.f32.mrb[0].mxu0
    %v1552 = vadd.f32 %v1454, %v1551
    %v1553 = vpop.f32.mrb[0].mxu0
    %1554 = vmatprep.mubr.f32.mxu0 %v1372
    %1555 = vmatmul.mubr.f32.gmra.mrb[0].mxu0 %v1371
    %v1556 = vpop.f32.mrb[0].mxu0
    %v1557 = vadd.f32 %v1454, %v1556
    %v1558 = vpop.f32.mrb[0].mxu0
    %1559 = vmatprep.mubr.f32.mxu0 %v1374
    %1560 = vmatmul.mubr.f32.gmra.mrb[0].mxu0 %v1373
    %v1561 = vpop.f32.mrb[0].mxu0
    %v1562 = vadd.f32 %v1454, %v1561
    %v1563 = vpop.f32.mrb[0].mxu0
    %1564 = vmatprep.mubr.f32.mxu0 %v1376
    %1565 = vmatmul.mubr.f32.gmra.mrb[0].mxu0 %v1375
    %v1566 = vpop.f32.mrb[0].mxu0
    %v1567 = vadd.f32 %v1454, %v1566
    %v1568 = vpop.f32.mrb[0].mxu0
    %1569 = vmatprep.mubr.f32.mxu0 %v1378
    %1570 = vmatmul.mubr.f32.gmra.mrb[0].mxu0 %v1377
    %v1571 = vpop.f32.mrb[0].mxu0
    %v1572 = vadd.f32 %v1454, %v1571
    %v1573 = vpop.f32.mrb[0].mxu0
    %1574 = vmatprep.mubr.f32.mxu0 %v1380
    %1575 = vmatmul.mubr.f32.gmra.mrb[0].mxu0 %v1379
    %v1576 = vpop.f32.mrb[0].mxu0
    %v1577 = vadd.f32 %v1454, %v1576
    %v1578 = vpop.f32.mrb[0].mxu0
    %1579 = vmatprep.mubr.f32.mxu0 %v1382
    %1580 = vmatmul.mubr.f32.gmra.mrb[0].mxu0 %v1381
    %v1581 = vpop.f32.mrb[0].mxu0
    %v1582 = vadd.f32 %v1454, %v1581
    %v1583 = vpop.f32.mrb[0].mxu0
    %1584 = vmatprep.mubr.f32.mxu0 %v1384
    %1585 = vmatmul.mubr.f32.gmra.mrb[0].mxu0 %v1383
    %v1586 = vpop.f32.mrb[0].mxu0
    %v1587 = vadd.f32 %v1454, %v1586
    %v1588 = vpop.f32.mrb[0].mxu0
    %1589 = vmatprep.mubr.f32.mxu0 %v1386
    %1590 = vmatmul.mubr.f32.gmra.mrb[0].mxu0 %v1385
    %v1591 = vpop.f32.mrb[0].mxu0
    %v1592 = vadd.f32 %v1454, %v1591
    %v1593 = vpop.f32.mrb[0].mxu0
    %1594 = vmatprep.mubr.f32.mxu0 %v1388
    %1595 = vmatmul.mubr.f32.gmra.mrb[0].mxu0 %v1387
    %v1596 = vpop.f32.mrb[0].mxu0
    %v1597 = vadd.f32 %v1454, %v1596
    %v1598 = vpop.f32.mrb[0].mxu0
    %1599 = vmatprep.mubr.f32.mxu0 %v1390
    %1600 = vmatmul.mubr.f32.gmra.mrb[0].mxu0 %v1389
    %v1601 = vpop.f32.mrb[0].mxu0
    %v1602 = vadd.f32 %v1454, %v1601
    %v1603 = vpop.f32.mrb[0].mxu0
    %1604 = vmatprep.mubr.f32.mxu0 %v1392
    %1605 = vmatmul.mubr.f32.gmra.mrb[0].mxu0 %v1391
    %v1606 = vpop.f32.mrb[0].mxu0
    %v1607 = vadd.f32 %v1454, %v1606
    %v1608 = vpop.f32.mrb[0].mxu0
    %1609 = vmatprep.mubr.f32.mxu0 %v1394
    %1610 = vmatmul.mubr.f32.gmra.mrb[0].mxu0 %v1393
    %v1611 = vpop.f32.mrb[0].mxu0
    %v1612 = vadd.f32 %v1454, %v1611
    %v1613 = vpop.f32.mrb[0].mxu0
    %1614 = vmatprep.mubr.f32.mxu0 %v1396
    %1615 = vmatmul.mubr.f32.gmra.mrb[0].mxu0 %v1395
    %v1616 = vpop.f32.mrb[0].mxu0
    %v1617 = vadd.f32 %v1454, %v1616
    %v1618 = vpop.f32.mrb[0].mxu0
    %1619 = vmatprep.mubr.f32.mxu0 %v1398
    %1620 = vmatmul.mubr.f32.gmra.mrb[0].mxu0 %v1397
    %v1621 = vpop.f32.mrb[0].mxu0
    %v1622 = vadd.f32 %v1454, %v1621
    %v1623 = vpop.f32.mrb[0].mxu0
    %1624 = vmatprep.mubr.f32.mxu0 %v1400
    %1625 = vmatmul.mubr.f32.gmra.mrb[0].mxu0 %v1399
    %v1626 = vpop.f32.mrb[0].mxu0
    %v1627 = vadd.f32 %v1454, %v1626
    %v1628 = vpop.f32.mrb[0].mxu0
    %1629 = vmatprep.mubr.f32.mxu0 %v1402
    %1630 = vmatmul.mubr.f32.gmra.mrb[0].mxu0 %v1401
    %v1631 = vpop.f32.mrb[0].mxu0
    %v1632 = vadd.f32 %v1454, %v1631
    %v1633 = vpop.f32.mrb[0].mxu0
    %1634 = vmatprep.mubr.f32.mxu0 %v1404
    %1635 = vmatmul.mubr.f32.gmra.mrb[0].mxu0 %v1403
    %v1636 = vpop.f32.mrb[0].mxu0
    %v1637 = vadd.f32 %v1454, %v1636
    %v1638 = vpop.f32.mrb[0].mxu0
    %1639 = vmatprep.mubr.f32.mxu0 %v1406
    %1640 = vmatmul.mubr.f32.gmra.mrb[0].mxu0 %v1405
    %v1641 = vpop.f32.mrb[0].mxu0
    %v1642 = vadd.f32 %v1454, %v1641
    %v1643 = vpop.f32.mrb[0].mxu0
    %1644 = vmatprep.mubr.f32.mxu0 %v1408
    %1645 = vmatmul.mubr.f32.gmra.mrb[0].mxu0 %v1407
    %v1646 = vpop.f32.mrb[0].mxu0
    %v1647 = vadd.f32 %v1454, %v1646
    %v1648 = vpop.f32.mrb[0].mxu0
    %1649 = vmatprep.mubr.f32.mxu0 %v1410
    %1650 = vmatmul.mubr.f32.gmra.mrb[0].mxu0 %v1409
    %v1651 = vpop.f32.mrb[0].mxu0
    %v1652 = vadd.f32 %v1454, %v1651
    %v1653 = vpop.f32.mrb[0].mxu0
    %1654 = vmatprep.mubr.f32.mxu0 %v1412
    %1655 = vmatmul.mubr.f32.gmra.mrb[0].mxu0 %v1411
    %v1656 = vpop.f32.mrb[0].mxu0
    %v1657 = vadd.f32 %v1454, %v1656
    %v1658 = vpop.f32.mrb[0].mxu0
    %1659 = vmatprep.mubr.f32.mxu0 %v1414
    %1660 = vmatmul.mubr.f32.gmra.mrb[0].mxu0 %v1413
    %v1661 = vpop.f32.mrb[0].mxu0
    %v1662 = vadd.f32 %v1454, %v1661
    %v1663 = vpop.f32.mrb[0].mxu0
    %1664 = vmatprep.mubr.f32.mxu0 %v1416
    %1665 = vmatmul.mubr.f32.gmra.mrb[0].mxu0 %v1415
    %v1666 = vpop.f32.mrb[0].mxu0
    %v1667 = vadd.f32 %v1454, %v1666
    %v1668 = vpop.f32.mrb[0].mxu0
    %1669 = vmatprep.mubr.f32.mxu0 %v1418
    %1670 = vmatmul.mubr.f32.gmra.mrb[0].mxu0 %v1417
    %v1671 = vpop.f32.mrb[0].mxu0
    %v1672 = vadd.f32 %v1454, %v1671
    %v1673 = vpop.f32.mrb[0].mxu0
    %1674 = vmatprep.mubr.f32.mxu0 %v1420
    %1675 = vmatmul.mubr.f32.gmra.mrb[0].mxu0 %v1419
    %v1676 = vpop.f32.mrb[0].mxu0
    %v1677 = vadd.f32 %v1454, %v1676
    %v1678 = vpop.f32.mrb[0].mxu0
    %1679 = vdwg.mxu0
    %v1680 = vxor.u32 %v1522, 2147483648
    %v1681 = vxor.u32 %v1527, 2147483648
    %v1682 = vxor.u32 %v1532, 2147483648
    %v1683 = vxor.u32 %v1537, 2147483648
    %v1684 = vxor.u32 %v1542, 2147483648
    %v1685 = vxor.u32 %v1547, 2147483648
    %v1686 = vxor.u32 %v1552, 2147483648
    %v1687 = vxor.u32 %v1557, 2147483648
    %v1688 = vxor.u32 %v1562, 2147483648
    %v1689 = vxor.u32 %v1567, 2147483648
    %v1690 = vxor.u32 %v1572, 2147483648
    %v1691 = vxor.u32 %v1577, 2147483648
    %v1692 = vxor.u32 %v1582, 2147483648
    %v1693 = vxor.u32 %v1587, 2147483648
    %v1694 = vxor.u32 %v1592, 2147483648
    %v1695 = vxor.u32 %v1597, 2147483648
    %v1696 = vxor.u32 %v1602, 2147483648
    %v1697 = vxor.u32 %v1607, 2147483648
    %v1698 = vxor.u32 %v1612, 2147483648
    %v1699 = vxor.u32 %v1617, 2147483648
    %v1700 = vxor.u32 %v1622, 2147483648
    %v1701 = vxor.u32 %v1627, 2147483648
    %v1702 = vxor.u32 %v1632, 2147483648
    %v1703 = vxor.u32 %v1637, 2147483648
    %v1704 = vxor.u32 %v1642, 2147483648
    %v1705 = vxor.u32 %v1647, 2147483648
    %v1706 = vxor.u32 %v1652, 2147483648
    %v1707 = vxor.u32 %v1657, 2147483648
    %v1708 = vxor.u32 %v1662, 2147483648
    %v1709 = vxor.u32 %v1667, 2147483648
    %v1710 = vxor.u32 %v1672, 2147483648
    %v1711 = vxor.u32 %v1677, 2147483648
    %v1712 = vmul.f32 %v1680, 1.442695
    %v1713 = vpow.pop %v1712
    %v1714 = vmul.f32 %v1681, 1.442695
    %v1715 = vpow.pop %v1714
    %v1716 = vmul.f32 %v1682, 1.442695
    %v1717 = vpow.pop %v1716
    %v1718 = vmul.f32 %v1683, 1.442695
    %v1719 = vpow.pop %v1718
    %v1720 = vmul.f32 %v1684, 1.442695
    %v1721 = vpow.pop %v1720
    %v1722 = vmul.f32 %v1685, 1.442695
    %v1723 = vpow.pop %v1722
    %v1724 = vmul.f32 %v1686, 1.442695
    %v1725 = vpow.pop %v1724
    %v1726 = vmul.f32 %v1687, 1.442695
    %v1727 = vpow.pop %v1726
    %v1728 = vmul.f32 %v1688, 1.442695
    %v1729 = vpow.pop %v1728
    %v1730 = vmul.f32 %v1689, 1.442695
    %v1731 = vpow.pop %v1730
    %v1732 = vmul.f32 %v1690, 1.442695
    %v1733 = vpow.pop %v1732
    %v1734 = vmul.f32 %v1691, 1.442695
    %v1735 = vpow.pop %v1734
    %v1736 = vmul.f32 %v1692, 1.442695
    %v1737 = vpow.pop %v1736
    %v1738 = vmul.f32 %v1693, 1.442695
    %v1739 = vpow.pop %v1738
    %v1740 = vmul.f32 %v1694, 1.442695
    %v1741 = vpow.pop %v1740
    %v1742 = vmul.f32 %v1695, 1.442695
    %v1743 = vpow.pop %v1742
    %v1744 = vmul.f32 %v1696, 1.442695
    %v1745 = vpow.pop %v1744
    %v1746 = vmul.f32 %v1697, 1.442695
    %v1747 = vpow.pop %v1746
    %v1748 = vmul.f32 %v1698, 1.442695
    %v1749 = vpow.pop %v1748
    %v1750 = vmul.f32 %v1699, 1.442695
    %v1751 = vpow.pop %v1750
    %v1752 = vmul.f32 %v1700, 1.442695
    %v1753 = vpow.pop %v1752
    %v1754 = vmul.f32 %v1701, 1.442695
    %v1755 = vpow.pop %v1754
    %v1756 = vmul.f32 %v1702, 1.442695
    %v1757 = vpow.pop %v1756
    %v1758 = vmul.f32 %v1703, 1.442695
    %v1759 = vpow.pop %v1758
    %v1760 = vmul.f32 %v1704, 1.442695
    %v1761 = vpow.pop %v1760
    %v1762 = vmul.f32 %v1705, 1.442695
    %v1763 = vpow.pop %v1762
    %v1764 = vmul.f32 %v1706, 1.442695
    %v1765 = vpow.pop %v1764
    %v1766 = vmul.f32 %v1707, 1.442695
    %v1767 = vpow.pop %v1766
    %v1768 = vmul.f32 %v1708, 1.442695
    %v1769 = vpow.pop %v1768
    %v1770 = vmul.f32 %v1709, 1.442695
    %v1771 = vpow.pop %v1770
    %v1772 = vmul.f32 %v1710, 1.442695
    %v1773 = vpow.pop %v1772
    %v1774 = vmul.f32 %v1711, 1.442695
    %v1775 = vpow.pop %v1774
    %v1776 = vadd.f32 %v1713, 1.0
    %v1777 = vadd.f32 %v1715, 1.0
    %v1778 = vadd.f32 %v1717, 1.0
    %v1779 = vadd.f32 %v1719, 1.0
    %v1780 = vadd.f32 %v1721, 1.0
    %v1781 = vadd.f32 %v1723, 1.0
    %v1782 = vadd.f32 %v1725, 1.0
    %v1783 = vadd.f32 %v1727, 1.0
    %v1784 = vadd.f32 %v1729, 1.0
    %v1785 = vadd.f32 %v1731, 1.0
    %v1786 = vadd.f32 %v1733, 1.0
    %v1787 = vadd.f32 %v1735, 1.0
    %v1788 = vadd.f32 %v1737, 1.0
    %v1789 = vadd.f32 %v1739, 1.0
    %v1790 = vadd.f32 %v1741, 1.0
    %v1791 = vadd.f32 %v1743, 1.0
    %v1792 = vadd.f32 %v1745, 1.0
    %v1793 = vadd.f32 %v1747, 1.0
    %v1794 = vadd.f32 %v1749, 1.0
    %v1795 = vadd.f32 %v1751, 1.0
    %v1796 = vadd.f32 %v1753, 1.0
    %v1797 = vadd.f32 %v1755, 1.0
    %v1798 = vadd.f32 %v1757, 1.0
    %v1799 = vadd.f32 %v1759, 1.0
    %v1800 = vadd.f32 %v1761, 1.0
    %v1801 = vadd.f32 %v1763, 1.0
    %v1802 = vadd.f32 %v1765, 1.0
    %v1803 = vadd.f32 %v1767, 1.0
    %v1804 = vadd.f32 %v1769, 1.0
    %v1805 = vadd.f32 %v1771, 1.0
    %v1806 = vadd.f32 %v1773, 1.0
    %v1807 = vadd.f32 %v1775, 1.0
    %v1808 = vrcp.pop %v1776
    %v1809 = vmul.f32 1.0, %v1808
    %v1810 = vrcp.pop %v1777
    %v1811 = vmul.f32 1.0, %v1810
    %v1812 = vrcp.pop %v1778
    %v1813 = vmul.f32 1.0, %v1812
    %v1814 = vrcp.pop %v1779
    %v1815 = vmul.f32 1.0, %v1814
    %v1816 = vrcp.pop %v1780
    %v1817 = vmul.f32 1.0, %v1816
    %v1818 = vrcp.pop %v1781
    %v1819 = vmul.f32 1.0, %v1818
    %v1820 = vrcp.pop %v1782
    %v1821 = vmul.f32 1.0, %v1820
    %v1822 = vrcp.pop %v1783
    %v1823 = vmul.f32 1.0, %v1822
    %v1824 = vrcp.pop %v1784
    %v1825 = vmul.f32 1.0, %v1824
    %v1826 = vrcp.pop %v1785
    %v1827 = vmul.f32 1.0, %v1826
    %v1828 = vrcp.pop %v1786
    %v1829 = vmul.f32 1.0, %v1828
    %v1830 = vrcp.pop %v1787
    %v1831 = vmul.f32 1.0, %v1830
    %v1832 = vrcp.pop %v1788
    %v1833 = vmul.f32 1.0, %v1832
    %v1834 = vrcp.pop %v1789
    %v1835 = vmul.f32 1.0, %v1834
    %v1836 = vrcp.pop %v1790
    %v1837 = vmul.f32 1.0, %v1836
    %v1838 = vrcp.pop %v1791
    %v1839 = vmul.f32 1.0, %v1838
    %v1840 = vrcp.pop %v1792
    %v1841 = vmul.f32 1.0, %v1840
    %v1842 = vrcp.pop %v1793
    %v1843 = vmul.f32 1.0, %v1842
    %v1844 = vrcp.pop %v1794
    %v1845 = vmul.f32 1.0, %v1844
    %v1846 = vrcp.pop %v1795
    %v1847 = vmul.f32 1.0, %v1846
    %v1848 = vrcp.pop %v1796
    %v1849 = vmul.f32 1.0, %v1848
    %v1850 = vrcp.pop %v1797
    %v1851 = vmul.f32 1.0, %v1850
    %v1852 = vrcp.pop %v1798
    %v1853 = vmul.f32 1.0, %v1852
    %v1854 = vrcp.pop %v1799
    %v1855 = vmul.f32 1.0, %v1854
    %v1856 = vrcp.pop %v1800
    %v1857 = vmul.f32 1.0, %v1856
    %v1858 = vrcp.pop %v1801
    %v1859 = vmul.f32 1.0, %v1858
    %v1860 = vrcp.pop %v1802
    %v1861 = vmul.f32 1.0, %v1860
    %v1862 = vrcp.pop %v1803
    %v1863 = vmul.f32 1.0, %v1862
    %v1864 = vrcp.pop %v1804
    %v1865 = vmul.f32 1.0, %v1864
    %v1866 = vrcp.pop %v1805
    %v1867 = vmul.f32 1.0, %v1866
    %v1868 = vrcp.pop %v1806
    %v1869 = vmul.f32 1.0, %v1868
    %v1870 = vrcp.pop %v1807
    %v1871 = vmul.f32 1.0, %v1870
    %1872 = vst [vmem:[#allocation12] sm:$0xff] %v1809
    %1873 = vst [vmem:[#allocation12 + $0x8] sm:$0xff] %v1811
    %1874 = vst [vmem:[#allocation12 + $0x10] sm:$0xff] %v1813
    %1875 = vst [vmem:[#allocation12 + $0x18] sm:$0xff] %v1815
    %1876 = vst [vmem:[#allocation12 + $0x20] sm:$0xff] %v1817
    %1877 = vst [vmem:[#allocation12 + $0x28] sm:$0xff] %v1819
    %1878 = vst [vmem:[#allocation12 + $0x30] sm:$0xff] %v1821
    %1879 = vst [vmem:[#allocation12 + $0x38] sm:$0xff] %v1823
    %1880 = vst [vmem:[#allocation12 + $0x40] sm:$0xff] %v1825
    %1881 = vst [vmem:[#allocation12 + $0x48] sm:$0xff] %v1827
    %1882 = vst [vmem:[#allocation12 + $0x50] sm:$0xff] %v1829
    %1883 = vst [vmem:[#allocation12 + $0x58] sm:$0xff] %v1831
    %1884 = vst [vmem:[#allocation12 + $0x60] sm:$0xff] %v1833
    %1885 = vst [vmem:[#allocation12 + $0x68] sm:$0xff] %v1835
    %1886 = vst [vmem:[#allocation12 + $0x70] sm:$0xff] %v1837
    %1887 = vst [vmem:[#allocation12 + $0x78] sm:$0xff] %v1839
    %1888 = vst [vmem:[#allocation12 + $0x80] sm:$0xff] %v1841
    %1889 = vst [vmem:[#allocation12 + $0x88] sm:$0xff] %v1843
    %1890 = vst [vmem:[#allocation12 + $0x90] sm:$0xff] %v1845
    %1891 = vst [vmem:[#allocation12 + $0x98] sm:$0xff] %v1847
    %1892 = vst [vmem:[#allocation12 + $0xa0] sm:$0xff] %v1849
    %1893 = vst [vmem:[#allocation12 + $0xa8] sm:$0xff] %v1851
    %1894 = vst [vmem:[#allocation12 + $0xb0] sm:$0xff] %v1853
    %1895 = vst [vmem:[#allocation12 + $0xb8] sm:$0xff] %v1855
    %1896 = vst [vmem:[#allocation12 + $0xc0] sm:$0xff] %v1857
    %1897 = vst [vmem:[#allocation12 + $0xc8] sm:$0xff] %v1859
    %1898 = vst [vmem:[#allocation12 + $0xd0] sm:$0xff] %v1861
    %1899 = vst [vmem:[#allocation12 + $0xd8] sm:$0xff] %v1863
    %1900 = vst [vmem:[#allocation12 + $0xe0] sm:$0xff] %v1865
    %1901 = vst [vmem:[#allocation12 + $0xe8] sm:$0xff] %v1867
    %1902 = vst [vmem:[#allocation12 + $0xf0] sm:$0xff] %v1869
    %1903 = vst [vmem:[#allocation12 + $0xf8] sm:$0xff] %v1871
    // Predicated region
    $region58: #{tpu_custom_call.1} parent=1 // pred_check
      _
    $region59: #{tpu_custom_call.1} parent=1 // pred_check_branch
      %1905 = sbr.rel (0) target = $region61
    $region60: #{tpu_custom_call.1} parent=1 // pred_region
      %s1907 = ssub.s32 4096, 4096
      %1908 = vsyncadd [#allocation5], %s1907
      %s1909 = sshll.u32 [#allocation12], 4
      %s1910 = int_to_ptr.vmem [resolvable:$true] %s1909
      %1915 = dma.vmem_to_hbm [thread:$0]  %s1910, 4096, %s9, [#allocation5], 128, 128, 8
    $region61: #{tpu_custom_call.1} parent=1 // pred_fallthru
      _
    // Predicated region
    $region62: #{tpu_custom_call.1} parent=1 // pred_check
      _
    $region63: #{tpu_custom_call.1} parent=1 // pred_check_branch
      %1917 = sbr.rel (0) target = $region65
    $region64: #{tpu_custom_call.1} parent=1 // pred_region
      %1918 = dma.done [#allocation5], 4096
    $region65: #{tpu_custom_call.1} parent=1 // pred_fallthru
      _
    %1919 = vsyncpa [#allocation4], 1
    %1920 = vsyncpa [#allocation7], 1
    %1921 = vsyncpa [#allocation10], 1
    %1922 = vsyncpa [#allocation5], 1

</llo_original>
